<compile_context>
chip_gen: v7x
topology: tpu7x:2x2x1
jax: 0.10.0
libtpu: 0.0.40
codegen_flags: <defaults>
</compile_context>

<pallas_src>
import functools

import jax
import jax.numpy as jnp
from jax.experimental import pallas as pl
from jax.experimental.pallas import tpu as pltpu

HIDDEN = 50          # LSTM hidden size (PyTorch spec)
INPUT = 1            # LSTM input size
OUT = 1              # Linear output size
HID_PAD = 128        # hidden dim padded to one 128-lane block
GATE_PAD = 128       # each gate padded to one 128-lane block (4*GATE_PAD cols)


def _lstm_kernel(xaug_ref, w_aug_ref, h_out_ref, h_scr, c_scr, *, t_steps):
    # xaug_ref:  (T, Bp, HID_PAD)   sparse augmented input: lane 50 = x_t,
    #                               lane 51 = 1.0, all other lanes 0
    # w_aug_ref: (HID_PAD, 4*GATE_PAD) augmented recurrent weights:
    #                               rows 0..49 = W_hh^T, row 50 = W_ih^T,
    #                               row 51 = b_ih + b_hh; i/f/o gate columns
    #                               pre-scaled by 0.5 (tanh half-angle trick)
    # h_out_ref: (T, Bp, HID_PAD)   hidden states for this time chunk
    # h_scr/c_scr: (Bp, HID_PAD)    recurrent state carried across chunks
    @pl.when(pl.program_id(0) == 0)
    def _():
        h_scr[...] = jnp.zeros_like(h_scr)
        c_scr[...] = jnp.zeros_like(c_scr)

    GP = GATE_PAD
    w_aug = w_aug_ref[...]                        # invariant RHS for the chunk

    def step(tt, carry):
        h_prev, c_prev = carry                    # live in vregs, not VMEM
        # Augmented state: padded lanes of h_prev are exactly 0, so adding the
        # sparse xaug row places x_t in lane 50 and 1.0 in lane 51.
        h_aug = h_prev + xaug_ref[tt]             # (Bp, HID_PAD)
        # One matmul gives input + recurrent + bias contributions for all 4
        # gates (PyTorch order i, f, g, o), each in its own 128-lane block.
        gates = jnp.dot(h_aug, w_aug, preferred_element_type=jnp.float32)
        # Single tanh over the whole gate block; sigmoid(z) = 0.5*tanh(z/2)+0.5
        # (the 0.5 pre-scale of z is folded into the i/f/o weight columns).
        t = jnp.tanh(gates)                       # (Bp, 4*GP)
        i_g = 0.5 * t[:, 0 * GP:1 * GP] + 0.5
        f_g = 0.5 * t[:, 1 * GP:2 * GP] + 0.5
        g_g = t[:, 2 * GP:3 * GP]
        o_g = 0.5 * t[:, 3 * GP:4 * GP] + 0.5
        c_new = f_g * c_prev + i_g * g_g          # padded lanes stay exactly 0
        h_new = o_g * jnp.tanh(c_new)
        h_out_ref[tt] = h_new
        return (h_new, c_new)

    h_fin, c_fin = jax.lax.fori_loop(
        0, t_steps, step, (h_scr[...], c_scr[...]), unroll=8)
    h_scr[...] = h_fin
    c_scr[...] = c_fin


@functools.partial(jax.jit, static_argnames=("time_chunk",))
def lstm_model_forward(x, params, time_chunk=128):
    """x: (batch, seq, 1) float32 -> (batch, seq, 1) float32."""
    B, S, I = x.shape
    assert I == INPUT
    H, HP, GP = HIDDEN, HID_PAD, GATE_PAD
    w_ih, w_hh, b_ih, b_hh, w_lin, b_lin = (
        params["w_ih"], params["w_hh"], params["b_ih"], params["b_hh"],
        params["w_lin"], params["b_lin"])

    # ---- static padding / chunking parameters -------------------------------
    Bp = ((B + 7) // 8) * 8                       # batch -> multiple of 8
    T = min(time_chunk, S)                        # timesteps per grid step
    n_chunks = (S + T - 1) // T
    Sp = n_chunks * T                             # seq padded to chunk multiple

    # ---- augmented recurrent weight (HID_PAD, 4*GATE_PAD) --------------------
    # rows: [W_hh^T (50) ; W_ih^T (1) ; b_ih+b_hh (1) ; zeros (76)]
    # cols: gate-padded (i, f, g, o), each to 128 lanes; i/f/o scaled by 0.5.
    w_all = jnp.concatenate(
        [w_hh.T, w_ih.T, (b_ih + b_hh)[None, :]], axis=0)       # (H+2, 4H)
    w_all = w_all.reshape(H + 2, 4, H)
    w_all = jnp.pad(w_all, ((0, 0), (0, 0), (0, GP - H)))       # (H+2, 4, GP)
    gate_scale = jnp.array([0.5, 0.5, 1.0, 0.5], jnp.float32).reshape(1, 4, 1)
    w_all = (w_all * gate_scale).reshape(H + 2, 4 * GP)
    w_aug = jnp.pad(w_all, ((0, HP - (H + 2)), (0, 0)))         # (128, 512)

    # ---- sparse augmented input stream (Sp, Bp, HID_PAD) ---------------------
    # lane H (=50): x_t, lane H+1 (=51): 1.0, everything else 0.  Transpose the
    # tiny (B, S, 1) tensor, not anything 128x larger.
    x_tm = jnp.transpose(x, (1, 0, 2)).astype(jnp.float32)      # (S, B, 1)
    xaug = jnp.concatenate(
        [jnp.zeros((S, B, H), jnp.float32),
         x_tm,
         jnp.ones((S, B, 1), jnp.float32),
         jnp.zeros((S, B, HP - H - 2), jnp.float32)], axis=-1)  # (S, B, 128)
    xaug = jnp.pad(xaug, ((0, Sp - S), (0, Bp - B), (0, 0)))    # (Sp, Bp, 128)

    # ---- Pallas: serial recurrence over time chunks --------------------------
    h_tm = pl.pallas_call(
        functools.partial(_lstm_kernel, t_steps=T),
        out_shape=jax.ShapeDtypeStruct((Sp, Bp, HP), jnp.float32),
        grid_spec=pltpu.PrefetchScalarGridSpec(
            num_scalar_prefetch=0,
            grid=(n_chunks,),
            in_specs=[
                pl.BlockSpec((T, Bp, HP), lambda c: (c, 0, 0)),
                pl.BlockSpec((HP, 4 * GP), lambda c: (0, 0)),
            ],
            out_specs=pl.BlockSpec((T, Bp, HP), lambda c: (c, 0, 0)),
            scratch_shapes=[
                pltpu.VMEM((Bp, HP), jnp.float32),   # h carried across chunks
                pltpu.VMEM((Bp, HP), jnp.float32),   # c carried across chunks
            ],
        ),
        compiler_params=pltpu.CompilerParams(
            dimension_semantics=("arbitrary",),      # recurrence is sequential
            vmem_limit_bytes=32 * 1024 * 1024),
    )(xaug, w_aug)

    # ---- hoisted output Linear (plain XLA) on the valid region --------------
    hs = h_tm[:S, :B, :H]                                       # (S, B, H)
    y_tm = hs @ w_lin.T + b_lin                                 # (S, B, OUT)
    return jnp.transpose(y_tm, (1, 0, 2))                       # (B, S, OUT)


def init_params(key):
    """Deterministic init mimicking PyTorch's uniform(-1/sqrt(H), 1/sqrt(H))."""
    ks = jax.random.split(key, 6)
    bound = 1.0 / jnp.sqrt(jnp.float32(HIDDEN))
    u = lambda k, shape: jax.random.uniform(
        k, shape, jnp.float32, minval=-bound, maxval=bound)
    return {
        "w_ih": u(ks[0], (4 * HIDDEN, INPUT)),
        "w_hh": u(ks[1], (4 * HIDDEN, HIDDEN)),
        "b_ih": u(ks[2], (4 * HIDDEN,)),
        "b_hh": u(ks[3], (4 * HIDDEN,)),
        "w_lin": u(ks[4], (OUT, HIDDEN)),
        "b_lin": u(ks[5], (OUT,)),
    }


def _reference_forward(x, p):
    """Pure-JAX reference (lax.scan) of the same PyTorch LSTM + Linear."""
    B, S, _ = x.shape
    H = HIDDEN

    def step(carry, x_t):
        h, c = carry
        gates = x_t @ p["w_ih"].T + h @ p["w_hh"].T + p["b_ih"] + p["b_hh"]
        i = jax.nn.sigmoid(gates[:, 0 * H:1 * H])
        f = jax.nn.sigmoid(gates[:, 1 * H:2 * H])
        g = jnp.tanh(gates[:, 2 * H:3 * H])
        o = jax.nn.sigmoid(gates[:, 3 * H:4 * H])
        c = f * c + i * g
        h = o * jnp.tanh(c)
        return (h, c), h

    h0 = jnp.zeros((B, H), jnp.float32)
    c0 = jnp.zeros((B, H), jnp.float32)
    _, hs = jax.lax.scan(step, (h0, c0), jnp.transpose(x, (1, 0, 2)))
    y = hs @ p["w_lin"].T + p["b_lin"]                          # (S, B, OUT)
    return jnp.transpose(y, (1, 0, 2))


if __name__ == "__main__":
    key = jax.random.PRNGKey(0)
    k_param, k_x = jax.random.split(key)

    params = init_params(k_param)
    B, S = 2, 8
    x = jax.random.normal(k_x, (B, S, INPUT), dtype=jnp.float32)

    y = lstm_model_forward(x, params)
    y = jax.block_until_ready(y)

    y_ref = _reference_forward(x, params)
    assert y.shape == (B, S, OUT)
    assert jnp.allclose(y, y_ref, atol=1e-4, rtol=1e-4), "mismatch vs reference"

    print("KERNEL_OK")
</pallas_src>

<mosaic_0001>
module attributes {stable_mosaic.version = 11 : i64} {
  func.func @_lstm_kernel(%arg0: i32, %arg1: memref<8x8x128xf32, #tpu.memory_space<vmem>>, %arg2: memref<128x512xf32, #tpu.memory_space<vmem>>, %arg3: memref<8x8x128xf32, #tpu.memory_space<vmem>>, %arg4: memref<8x128xf32, #tpu.memory_space<vmem>>, %arg5: memref<8x128xf32, #tpu.memory_space<vmem>>) attributes {dimension_semantics = [#tpu.dimension_semantics<arbitrary>], iteration_bounds = array<i64: 1>, scalar_prefetch = 0 : i64, scratch_operands = 2 : i64, tpu.core_type = #tpu.core_type<tc>, window_params = [{transform_indices = @transform_0, window_bounds = array<i64: 8, 8, 128>}, {pipeline_mode = #tpu.pipeline_mode<synchronous>, transform_indices = @transform_1, window_bounds = array<i64: 128, 512>}, {transform_indices = @transform_2, window_bounds = array<i64: 8, 8, 128>}]} {
    %c0_i32 = arith.constant 0 : i32
    %0 = arith.cmpi eq, %arg0, %c0_i32 : i32
    %1 = arith.extui %0 : i1 to i32
    %c0_i32_0 = arith.constant 0 : i32
    %2 = arith.cmpi ne, %1, %c0_i32_0 : i32
    scf.if %2 {
      %cst_98 = arith.constant 0.000000e+00 : f32
      %256 = vector.broadcast %cst_98 : f32 to vector<8x128xf32>
      %c0_99 = arith.constant 0 : index
      %c0_100 = arith.constant 0 : index
      %257 = vector.load %arg4[%c0_99, %c0_100] : memref<8x128xf32, #tpu.memory_space<vmem>>, vector<8x128xf32>
      tpu.vector_store %arg4[%c0_99, %c0_100], %256 {strides = array<i32>} : memref<8x128xf32, #tpu.memory_space<vmem>>, vector<8x128xf32>,
      %cst_101 = arith.constant 0.000000e+00 : f32
      %258 = vector.broadcast %cst_101 : f32 to vector<8x128xf32>
      %c0_102 = arith.constant 0 : index
      %c0_103 = arith.constant 0 : index
      %259 = vector.load %arg5[%c0_102, %c0_103] : memref<8x128xf32, #tpu.memory_space<vmem>>, vector<8x128xf32>
      tpu.vector_store %arg5[%c0_102, %c0_103], %258 {strides = array<i32>} : memref<8x128xf32, #tpu.memory_space<vmem>>, vector<8x128xf32>,
    } else {
    }
    %c0 = arith.constant 0 : index
    %c0_1 = arith.constant 0 : index
    %3 = vector.load %arg2[%c0, %c0_1] : memref<128x512xf32, #tpu.memory_space<vmem>>, vector<128x512xf32>
    %c0_2 = arith.constant 0 : index
    %c0_3 = arith.constant 0 : index
    %4 = vector.load %arg4[%c0_2, %c0_3] : memref<8x128xf32, #tpu.memory_space<vmem>>, vector<8x128xf32>
    %c0_4 = arith.constant 0 : index
    %c0_5 = arith.constant 0 : index
    %5 = vector.load %arg5[%c0_4, %c0_5] : memref<8x128xf32, #tpu.memory_space<vmem>>, vector<8x128xf32>
    %c0_i32_6 = arith.constant 0 : i32
    %6 = arith.index_cast %c0_i32_6 : i32 to index
    %c0_7 = arith.constant 0 : index
    %c0_8 = arith.constant 0 : index
    %7 = vector.load %arg1[%6, %c0_7, %c0_8] : memref<8x8x128xf32, #tpu.memory_space<vmem>>, vector<1x8x128xf32>
    %8 = vector.shape_cast %7 : vector<1x8x128xf32> to vector<8x128xf32>
    %9 = arith.addf %4, %8 : vector<8x128xf32>
    %cst = arith.constant dense<0.000000e+00> : vector<8x512xf32>
    %10 = tpu.matmul %9, %3, %cst {dimension_numbers = #tpu.dot_dimension_numbers<[1], [0], [0], [1], [0, 0, 1, 1], [], []>} : vector<8x128xf32>, vector<128x512xf32>, vector<8x512xf32> -> vector<8x512xf32>
    %11 = math.tanh %10 : vector<8x512xf32>
    %12 = vector.extract_strided_slice %11 {offsets = [0, 0], sizes = [8, 128], strides = [1, 1]} : vector<8x512xf32> to vector<8x128xf32>
    %cst_9 = arith.constant 5.000000e-01 : f32
    %13 = vector.broadcast %cst_9 : f32 to vector<8x128xf32>
    %14 = arith.mulf %13, %12 : vector<8x128xf32>
    %cst_10 = arith.constant 5.000000e-01 : f32
    %15 = vector.broadcast %cst_10 : f32 to vector<8x128xf32>
    %16 = arith.addf %14, %15 : vector<8x128xf32>
    %17 = vector.extract_strided_slice %11 {offsets = [0, 128], sizes = [8, 128], strides = [1, 1]} : vector<8x512xf32> to vector<8x128xf32>
    %cst_11 = arith.constant 5.000000e-01 : f32
    %18 = vector.broadcast %cst_11 : f32 to vector<8x128xf32>
    %19 = arith.mulf %18, %17 : vector<8x128xf32>
    %cst_12 = arith.constant 5.000000e-01 : f32
    %20 = vector.broadcast %cst_12 : f32 to vector<8x128xf32>
    %21 = arith.addf %19, %20 : vector<8x128xf32>
    %22 = vector.extract_strided_slice %11 {offsets = [0, 256], sizes = [8, 128], strides = [1, 1]} : vector<8x512xf32> to vector<8x128xf32>
    %23 = vector.extract_strided_slice %11 {offsets = [0, 384], sizes = [8, 128], strides = [1, 1]} : vector<8x512xf32> to vector<8x128xf32>
    %cst_13 = arith.constant 5.000000e-01 : f32
    %24 = vector.broadcast %cst_13 : f32 to vector<8x128xf32>
    %25 = arith.mulf %24, %23 : vector<8x128xf32>
    %cst_14 = arith.constant 5.000000e-01 : f32
    %26 = vector.broadcast %cst_14 : f32 to vector<8x128xf32>
    %27 = arith.addf %25, %26 : vector<8x128xf32>
    %28 = arith.mulf %21, %5 : vector<8x128xf32>
    %29 = arith.mulf %16, %22 : vector<8x128xf32>
    %30 = arith.addf %28, %29 : vector<8x128xf32>
    %31 = math.tanh %30 : vector<8x128xf32>
    %32 = arith.mulf %27, %31 : vector<8x128xf32>
    %33 = arith.index_cast %c0_i32_6 : i32 to index
    %c0_15 = arith.constant 0 : index
    %c0_16 = arith.constant 0 : index
    %34 = vector.load %arg3[%33, %c0_15, %c0_16] : memref<8x8x128xf32, #tpu.memory_space<vmem>>, vector<1x8x128xf32>
    %35 = vector.shape_cast %34 : vector<1x8x128xf32> to vector<8x128xf32>
    %36 = vector.shape_cast %32 : vector<8x128xf32> to vector<1x8x128xf32>
    tpu.vector_store %arg3[%33, %c0_15, %c0_16], %36 {strides = array<i32>} : memref<8x8x128xf32, #tpu.memory_space<vmem>>, vector<1x8x128xf32>,
    %c1_i32 = arith.constant 1 : i32
    %37 = arith.index_cast %c1_i32 : i32 to index
    %c0_17 = arith.constant 0 : index
    %c0_18 = arith.constant 0 : index
    %38 = vector.load %arg1[%37, %c0_17, %c0_18] : memref<8x8x128xf32, #tpu.memory_space<vmem>>, vector<1x8x128xf32>
    %39 = vector.shape_cast %38 : vector<1x8x128xf32> to vector<8x128xf32>
    %40 = arith.addf %32, %39 : vector<8x128xf32>
    %cst_19 = arith.constant dense<0.000000e+00> : vector<8x512xf32>
    %41 = tpu.matmul %40, %3, %cst_19 {dimension_numbers = #tpu.dot_dimension_numbers<[1], [0], [0], [1], [0, 0, 1, 1], [], []>} : vector<8x128xf32>, vector<128x512xf32>, vector<8x512xf32> -> vector<8x512xf32>
    %42 = math.tanh %41 : vector<8x512xf32>
    %43 = vector.extract_strided_slice %42 {offsets = [0, 0], sizes = [8, 128], strides = [1, 1]} : vector<8x512xf32> to vector<8x128xf32>
    %cst_20 = arith.constant 5.000000e-01 : f32
    %44 = vector.broadcast %cst_20 : f32 to vector<8x128xf32>
    %45 = arith.mulf %44, %43 : vector<8x128xf32>
    %cst_21 = arith.constant 5.000000e-01 : f32
    %46 = vector.broadcast %cst_21 : f32 to vector<8x128xf32>
    %47 = arith.addf %45, %46 : vector<8x128xf32>
    %48 = vector.extract_strided_slice %42 {offsets = [0, 128], sizes = [8, 128], strides = [1, 1]} : vector<8x512xf32> to vector<8x128xf32>
    %cst_22 = arith.constant 5.000000e-01 : f32
    %49 = vector.broadcast %cst_22 : f32 to vector<8x128xf32>
    %50 = arith.mulf %49, %48 : vector<8x128xf32>
    %cst_23 = arith.constant 5.000000e-01 : f32
    %51 = vector.broadcast %cst_23 : f32 to vector<8x128xf32>
    %52 = arith.addf %50, %51 : vector<8x128xf32>
    %53 = vector.extract_strided_slice %42 {offsets = [0, 256], sizes = [8, 128], strides = [1, 1]} : vector<8x512xf32> to vector<8x128xf32>
    %54 = vector.extract_strided_slice %42 {offsets = [0, 384], sizes = [8, 128], strides = [1, 1]} : vector<8x512xf32> to vector<8x128xf32>
    %cst_24 = arith.constant 5.000000e-01 : f32
    %55 = vector.broadcast %cst_24 : f32 to vector<8x128xf32>
    %56 = arith.mulf %55, %54 : vector<8x128xf32>
    %cst_25 = arith.constant 5.000000e-01 : f32
    %57 = vector.broadcast %cst_25 : f32 to vector<8x128xf32>
    %58 = arith.addf %56, %57 : vector<8x128xf32>
    %59 = arith.mulf %52, %30 : vector<8x128xf32>
    %60 = arith.mulf %47, %53 : vector<8x128xf32>
    %61 = arith.addf %59, %60 : vector<8x128xf32>
    %62 = math.tanh %61 : vector<8x128xf32>
    %63 = arith.mulf %58, %62 : vector<8x128xf32>
    %64 = arith.index_cast %c1_i32 : i32 to index
    %c0_26 = arith.constant 0 : index
    %c0_27 = arith.constant 0 : index
    %65 = vector.load %arg3[%64, %c0_26, %c0_27] : memref<8x8x128xf32, #tpu.memory_space<vmem>>, vector<1x8x128xf32>
    %66 = vector.shape_cast %65 : vector<1x8x128xf32> to vector<8x128xf32>
    %67 = vector.shape_cast %63 : vector<8x128xf32> to vector<1x8x128xf32>
    tpu.vector_store %arg3[%64, %c0_26, %c0_27], %67 {strides = array<i32>} : memref<8x8x128xf32, #tpu.memory_space<vmem>>, vector<1x8x128xf32>,
    %c2_i32 = arith.constant 2 : i32
    %68 = arith.index_cast %c2_i32 : i32 to index
    %c0_28 = arith.constant 0 : index
    %c0_29 = arith.constant 0 : index
    %69 = vector.load %arg1[%68, %c0_28, %c0_29] : memref<8x8x128xf32, #tpu.memory_space<vmem>>, vector<1x8x128xf32>
    %70 = vector.shape_cast %69 : vector<1x8x128xf32> to vector<8x128xf32>
    %71 = arith.addf %63, %70 : vector<8x128xf32>
    %cst_30 = arith.constant dense<0.000000e+00> : vector<8x512xf32>
    %72 = tpu.matmul %71, %3, %cst_30 {dimension_numbers = #tpu.dot_dimension_numbers<[1], [0], [0], [1], [0, 0, 1, 1], [], []>} : vector<8x128xf32>, vector<128x512xf32>, vector<8x512xf32> -> vector<8x512xf32>
    %73 = math.tanh %72 : vector<8x512xf32>
    %74 = vector.extract_strided_slice %73 {offsets = [0, 0], sizes = [8, 128], strides = [1, 1]} : vector<8x512xf32> to vector<8x128xf32>
    %cst_31 = arith.constant 5.000000e-01 : f32
    %75 = vector.broadcast %cst_31 : f32 to vector<8x128xf32>
    %76 = arith.mulf %75, %74 : vector<8x128xf32>
    %cst_32 = arith.constant 5.000000e-01 : f32
    %77 = vector.broadcast %cst_32 : f32 to vector<8x128xf32>
    %78 = arith.addf %76, %77 : vector<8x128xf32>
    %79 = vector.extract_strided_slice %73 {offsets = [0, 128], sizes = [8, 128], strides = [1, 1]} : vector<8x512xf32> to vector<8x128xf32>
    %cst_33 = arith.constant 5.000000e-01 : f32
    %80 = vector.broadcast %cst_33 : f32 to vector<8x128xf32>
    %81 = arith.mulf %80, %79 : vector<8x128xf32>
    %cst_34 = arith.constant 5.000000e-01 : f32
    %82 = vector.broadcast %cst_34 : f32 to vector<8x128xf32>
    %83 = arith.addf %81, %82 : vector<8x128xf32>
    %84 = vector.extract_strided_slice %73 {offsets = [0, 256], sizes = [8, 128], strides = [1, 1]} : vector<8x512xf32> to vector<8x128xf32>
    %85 = vector.extract_strided_slice %73 {offsets = [0, 384], sizes = [8, 128], strides = [1, 1]} : vector<8x512xf32> to vector<8x128xf32>
    %cst_35 = arith.constant 5.000000e-01 : f32
    %86 = vector.broadcast %cst_35 : f32 to vector<8x128xf32>
    %87 = arith.mulf %86, %85 : vector<8x128xf32>
    %cst_36 = arith.constant 5.000000e-01 : f32
    %88 = vector.broadcast %cst_36 : f32 to vector<8x128xf32>
    %89 = arith.addf %87, %88 : vector<8x128xf32>
    %90 = arith.mulf %83, %61 : vector<8x128xf32>
    %91 = arith.mulf %78, %84 : vector<8x128xf32>
    %92 = arith.addf %90, %91 : vector<8x128xf32>
    %93 = math.tanh %92 : vector<8x128xf32>
    %94 = arith.mulf %89, %93 : vector<8x128xf32>
    %95 = arith.index_cast %c2_i32 : i32 to index
    %c0_37 = arith.constant 0 : index
    %c0_38 = arith.constant 0 : index
    %96 = vector.load %arg3[%95, %c0_37, %c0_38] : memref<8x8x128xf32, #tpu.memory_space<vmem>>, vector<1x8x128xf32>
    %97 = vector.shape_cast %96 : vector<1x8x128xf32> to vector<8x128xf32>
    %98 = vector.shape_cast %94 : vector<8x128xf32> to vector<1x8x128xf32>
    tpu.vector_store %arg3[%95, %c0_37, %c0_38], %98 {strides = array<i32>} : memref<8x8x128xf32, #tpu.memory_space<vmem>>, vector<1x8x128xf32>,
    %c3_i32 = arith.constant 3 : i32
    %99 = arith.index_cast %c3_i32 : i32 to index
    %c0_39 = arith.constant 0 : index
    %c0_40 = arith.constant 0 : index
    %100 = vector.load %arg1[%99, %c0_39, %c0_40] : memref<8x8x128xf32, #tpu.memory_space<vmem>>, vector<1x8x128xf32>
    %101 = vector.shape_cast %100 : vector<1x8x128xf32> to vector<8x128xf32>
    %102 = arith.addf %94, %101 : vector<8x128xf32>
    %cst_41 = arith.constant dense<0.000000e+00> : vector<8x512xf32>
    %103 = tpu.matmul %102, %3, %cst_41 {dimension_numbers = #tpu.dot_dimension_numbers<[1], [0], [0], [1], [0, 0, 1, 1], [], []>} : vector<8x128xf32>, vector<128x512xf32>, vector<8x512xf32> -> vector<8x512xf32>
    %104 = math.tanh %103 : vector<8x512xf32>
    %105 = vector.extract_strided_slice %104 {offsets = [0, 0], sizes = [8, 128], strides = [1, 1]} : vector<8x512xf32> to vector<8x128xf32>
    %cst_42 = arith.constant 5.000000e-01 : f32
    %106 = vector.broadcast %cst_42 : f32 to vector<8x128xf32>
    %107 = arith.mulf %106, %105 : vector<8x128xf32>
    %cst_43 = arith.constant 5.000000e-01 : f32
    %108 = vector.broadcast %cst_43 : f32 to vector<8x128xf32>
    %109 = arith.addf %107, %108 : vector<8x128xf32>
    %110 = vector.extract_strided_slice %104 {offsets = [0, 128], sizes = [8, 128], strides = [1, 1]} : vector<8x512xf32> to vector<8x128xf32>
    %cst_44 = arith.constant 5.000000e-01 : f32
    %111 = vector.broadcast %cst_44 : f32 to vector<8x128xf32>
    %112 = arith.mulf %111, %110 : vector<8x128xf32>
    %cst_45 = arith.constant 5.000000e-01 : f32
    %113 = vector.broadcast %cst_45 : f32 to vector<8x128xf32>
    %114 = arith.addf %112, %113 : vector<8x128xf32>
    %115 = vector.extract_strided_slice %104 {offsets = [0, 256], sizes = [8, 128], strides = [1, 1]} : vector<8x512xf32> to vector<8x128xf32>
    %116 = vector.extract_strided_slice %104 {offsets = [0, 384], sizes = [8, 128], strides = [1, 1]} : vector<8x512xf32> to vector<8x128xf32>
    %cst_46 = arith.constant 5.000000e-01 : f32
    %117 = vector.broadcast %cst_46 : f32 to vector<8x128xf32>
    %118 = arith.mulf %117, %116 : vector<8x128xf32>
    %cst_47 = arith.constant 5.000000e-01 : f32
    %119 = vector.broadcast %cst_47 : f32 to vector<8x128xf32>
    %120 = arith.addf %118, %119 : vector<8x128xf32>
    %121 = arith.mulf %114, %92 : vector<8x128xf32>
    %122 = arith.mulf %109, %115 : vector<8x128xf32>
    %123 = arith.addf %121, %122 : vector<8x128xf32>
    %124 = math.tanh %123 : vector<8x128xf32>
    %125 = arith.mulf %120, %124 : vector<8x128xf32>
    %126 = arith.index_cast %c3_i32 : i32 to index
    %c0_48 = arith.constant 0 : index
    %c0_49 = arith.constant 0 : index
    %127 = vector.load %arg3[%126, %c0_48, %c0_49] : memref<8x8x128xf32, #tpu.memory_space<vmem>>, vector<1x8x128xf32>
    %128 = vector.shape_cast %127 : vector<1x8x128xf32> to vector<8x128xf32>
    %129 = vector.shape_cast %125 : vector<8x128xf32> to vector<1x8x128xf32>
    tpu.vector_store %arg3[%126, %c0_48, %c0_49], %129 {strides = array<i32>} : memref<8x8x128xf32, #tpu.memory_space<vmem>>, vector<1x8x128xf32>,
    %c4_i32 = arith.constant 4 : i32
    %130 = arith.index_cast %c4_i32 : i32 to index
    %c0_50 = arith.constant 0 : index
    %c0_51 = arith.constant 0 : index
    %131 = vector.load %arg1[%130, %c0_50, %c0_51] : memref<8x8x128xf32, #tpu.memory_space<vmem>>, vector<1x8x128xf32>
    %132 = vector.shape_cast %131 : vector<1x8x128xf32> to vector<8x128xf32>
    %133 = arith.addf %125, %132 : vector<8x128xf32>
    %cst_52 = arith.constant dense<0.000000e+00> : vector<8x512xf32>
    %134 = tpu.matmul %133, %3, %cst_52 {dimension_numbers = #tpu.dot_dimension_numbers<[1], [0], [0], [1], [0, 0, 1, 1], [], []>} : vector<8x128xf32>, vector<128x512xf32>, vector<8x512xf32> -> vector<8x512xf32>
    %135 = math.tanh %134 : vector<8x512xf32>
    %136 = vector.extract_strided_slice %135 {offsets = [0, 0], sizes = [8, 128], strides = [1, 1]} : vector<8x512xf32> to vector<8x128xf32>
    %cst_53 = arith.constant 5.000000e-01 : f32
    %137 = vector.broadcast %cst_53 : f32 to vector<8x128xf32>
    %138 = arith.mulf %137, %136 : vector<8x128xf32>
    %cst_54 = arith.constant 5.000000e-01 : f32
    %139 = vector.broadcast %cst_54 : f32 to vector<8x128xf32>
    %140 = arith.addf %138, %139 : vector<8x128xf32>
    %141 = vector.extract_strided_slice %135 {offsets = [0, 128], sizes = [8, 128], strides = [1, 1]} : vector<8x512xf32> to vector<8x128xf32>
    %cst_55 = arith.constant 5.000000e-01 : f32
    %142 = vector.broadcast %cst_55 : f32 to vector<8x128xf32>
    %143 = arith.mulf %142, %141 : vector<8x128xf32>
    %cst_56 = arith.constant 5.000000e-01 : f32
    %144 = vector.broadcast %cst_56 : f32 to vector<8x128xf32>
    %145 = arith.addf %143, %144 : vector<8x128xf32>
    %146 = vector.extract_strided_slice %135 {offsets = [0, 256], sizes = [8, 128], strides = [1, 1]} : vector<8x512xf32> to vector<8x128xf32>
    %147 = vector.extract_strided_slice %135 {offsets = [0, 384], sizes = [8, 128], strides = [1, 1]} : vector<8x512xf32> to vector<8x128xf32>
    %cst_57 = arith.constant 5.000000e-01 : f32
    %148 = vector.broadcast %cst_57 : f32 to vector<8x128xf32>
    %149 = arith.mulf %148, %147 : vector<8x128xf32>
    %cst_58 = arith.constant 5.000000e-01 : f32
    %150 = vector.broadcast %cst_58 : f32 to vector<8x128xf32>
    %151 = arith.addf %149, %150 : vector<8x128xf32>
    %152 = arith.mulf %145, %123 : vector<8x128xf32>
    %153 = arith.mulf %140, %146 : vector<8x128xf32>
    %154 = arith.addf %152, %153 : vector<8x128xf32>
    %155 = math.tanh %154 : vector<8x128xf32>
    %156 = arith.mulf %151, %155 : vector<8x128xf32>
    %157 = arith.index_cast %c4_i32 : i32 to index
    %c0_59 = arith.constant 0 : index
    %c0_60 = arith.constant 0 : index
    %158 = vector.load %arg3[%157, %c0_59, %c0_60] : memref<8x8x128xf32, #tpu.memory_space<vmem>>, vector<1x8x128xf32>
    %159 = vector.shape_cast %158 : vector<1x8x128xf32> to vector<8x128xf32>
    %160 = vector.shape_cast %156 : vector<8x128xf32> to vector<1x8x128xf32>
    tpu.vector_store %arg3[%157, %c0_59, %c0_60], %160 {strides = array<i32>} : memref<8x8x128xf32, #tpu.memory_space<vmem>>, vector<1x8x128xf32>,
    %c5_i32 = arith.constant 5 : i32
    %161 = arith.index_cast %c5_i32 : i32 to index
    %c0_61 = arith.constant 0 : index
    %c0_62 = arith.constant 0 : index
    %162 = vector.load %arg1[%161, %c0_61, %c0_62] : memref<8x8x128xf32, #tpu.memory_space<vmem>>, vector<1x8x128xf32>
    %163 = vector.shape_cast %162 : vector<1x8x128xf32> to vector<8x128xf32>
    %164 = arith.addf %156, %163 : vector<8x128xf32>
    %cst_63 = arith.constant dense<0.000000e+00> : vector<8x512xf32>
    %165 = tpu.matmul %164, %3, %cst_63 {dimension_numbers = #tpu.dot_dimension_numbers<[1], [0], [0], [1], [0, 0, 1, 1], [], []>} : vector<8x128xf32>, vector<128x512xf32>, vector<8x512xf32> -> vector<8x512xf32>
    %166 = math.tanh %165 : vector<8x512xf32>
    %167 = vector.extract_strided_slice %166 {offsets = [0, 0], sizes = [8, 128], strides = [1, 1]} : vector<8x512xf32> to vector<8x128xf32>
    %cst_64 = arith.constant 5.000000e-01 : f32
    %168 = vector.broadcast %cst_64 : f32 to vector<8x128xf32>
    %169 = arith.mulf %168, %167 : vector<8x128xf32>
    %cst_65 = arith.constant 5.000000e-01 : f32
    %170 = vector.broadcast %cst_65 : f32 to vector<8x128xf32>
    %171 = arith.addf %169, %170 : vector<8x128xf32>
    %172 = vector.extract_strided_slice %166 {offsets = [0, 128], sizes = [8, 128], strides = [1, 1]} : vector<8x512xf32> to vector<8x128xf32>
    %cst_66 = arith.constant 5.000000e-01 : f32
    %173 = vector.broadcast %cst_66 : f32 to vector<8x128xf32>
    %174 = arith.mulf %173, %172 : vector<8x128xf32>
    %cst_67 = arith.constant 5.000000e-01 : f32
    %175 = vector.broadcast %cst_67 : f32 to vector<8x128xf32>
    %176 = arith.addf %174, %175 : vector<8x128xf32>
    %177 = vector.extract_strided_slice %166 {offsets = [0, 256], sizes = [8, 128], strides = [1, 1]} : vector<8x512xf32> to vector<8x128xf32>
    %178 = vector.extract_strided_slice %166 {offsets = [0, 384], sizes = [8, 128], strides = [1, 1]} : vector<8x512xf32> to vector<8x128xf32>
    %cst_68 = arith.constant 5.000000e-01 : f32
    %179 = vector.broadcast %cst_68 : f32 to vector<8x128xf32>
    %180 = arith.mulf %179, %178 : vector<8x128xf32>
    %cst_69 = arith.constant 5.000000e-01 : f32
    %181 = vector.broadcast %cst_69 : f32 to vector<8x128xf32>
    %182 = arith.addf %180, %181 : vector<8x128xf32>
    %183 = arith.mulf %176, %154 : vector<8x128xf32>
    %184 = arith.mulf %171, %177 : vector<8x128xf32>
    %185 = arith.addf %183, %184 : vector<8x128xf32>
    %186 = math.tanh %185 : vector<8x128xf32>
    %187 = arith.mulf %182, %186 : vector<8x128xf32>
    %188 = arith.index_cast %c5_i32 : i32 to index
    %c0_70 = arith.constant 0 : index
    %c0_71 = arith.constant 0 : index
    %189 = vector.load %arg3[%188, %c0_70, %c0_71] : memref<8x8x128xf32, #tpu.memory_space<vmem>>, vector<1x8x128xf32>
    %190 = vector.shape_cast %189 : vector<1x8x128xf32> to vector<8x128xf32>
    %191 = vector.shape_cast %187 : vector<8x128xf32> to vector<1x8x128xf32>
    tpu.vector_store %arg3[%188, %c0_70, %c0_71], %191 {strides = array<i32>} : memref<8x8x128xf32, #tpu.memory_space<vmem>>, vector<1x8x128xf32>,
    %c6_i32 = arith.constant 6 : i32
    %192 = arith.index_cast %c6_i32 : i32 to index
    %c0_72 = arith.constant 0 : index
    %c0_73 = arith.constant 0 : index
    %193 = vector.load %arg1[%192, %c0_72, %c0_73] : memref<8x8x128xf32, #tpu.memory_space<vmem>>, vector<1x8x128xf32>
    %194 = vector.shape_cast %193 : vector<1x8x128xf32> to vector<8x128xf32>
    %195 = arith.addf %187, %194 : vector<8x128xf32>
    %cst_74 = arith.constant dense<0.000000e+00> : vector<8x512xf32>
    %196 = tpu.matmul %195, %3, %cst_74 {dimension_numbers = #tpu.dot_dimension_numbers<[1], [0], [0], [1], [0, 0, 1, 1], [], []>} : vector<8x128xf32>, vector<128x512xf32>, vector<8x512xf32> -> vector<8x512xf32>
    %197 = math.tanh %196 : vector<8x512xf32>
    %198 = vector.extract_strided_slice %197 {offsets = [0, 0], sizes = [8, 128], strides = [1, 1]} : vector<8x512xf32> to vector<8x128xf32>
    %cst_75 = arith.constant 5.000000e-01 : f32
    %199 = vector.broadcast %cst_75 : f32 to vector<8x128xf32>
    %200 = arith.mulf %199, %198 : vector<8x128xf32>
    %cst_76 = arith.constant 5.000000e-01 : f32
    %201 = vector.broadcast %cst_76 : f32 to vector<8x128xf32>
    %202 = arith.addf %200, %201 : vector<8x128xf32>
    %203 = vector.extract_strided_slice %197 {offsets = [0, 128], sizes = [8, 128], strides = [1, 1]} : vector<8x512xf32> to vector<8x128xf32>
    %cst_77 = arith.constant 5.000000e-01 : f32
    %204 = vector.broadcast %cst_77 : f32 to vector<8x128xf32>
    %205 = arith.mulf %204, %203 : vector<8x128xf32>
    %cst_78 = arith.constant 5.000000e-01 : f32
    %206 = vector.broadcast %cst_78 : f32 to vector<8x128xf32>
    %207 = arith.addf %205, %206 : vector<8x128xf32>
    %208 = vector.extract_strided_slice %197 {offsets = [0, 256], sizes = [8, 128], strides = [1, 1]} : vector<8x512xf32> to vector<8x128xf32>
    %209 = vector.extract_strided_slice %197 {offsets = [0, 384], sizes = [8, 128], strides = [1, 1]} : vector<8x512xf32> to vector<8x128xf32>
    %cst_79 = arith.constant 5.000000e-01 : f32
    %210 = vector.broadcast %cst_79 : f32 to vector<8x128xf32>
    %211 = arith.mulf %210, %209 : vector<8x128xf32>
    %cst_80 = arith.constant 5.000000e-01 : f32
    %212 = vector.broadcast %cst_80 : f32 to vector<8x128xf32>
    %213 = arith.addf %211, %212 : vector<8x128xf32>
    %214 = arith.mulf %207, %185 : vector<8x128xf32>
    %215 = arith.mulf %202, %208 : vector<8x128xf32>
    %216 = arith.addf %214, %215 : vector<8x128xf32>
    %217 = math.tanh %216 : vector<8x128xf32>
    %218 = arith.mulf %213, %217 : vector<8x128xf32>
    %219 = arith.index_cast %c6_i32 : i32 to index
    %c0_81 = arith.constant 0 : index
    %c0_82 = arith.constant 0 : index
    %220 = vector.load %arg3[%219, %c0_81, %c0_82] : memref<8x8x128xf32, #tpu.memory_space<vmem>>, vector<1x8x128xf32>
    %221 = vector.shape_cast %220 : vector<1x8x128xf32> to vector<8x128xf32>
    %222 = vector.shape_cast %218 : vector<8x128xf32> to vector<1x8x128xf32>
    tpu.vector_store %arg3[%219, %c0_81, %c0_82], %222 {strides = array<i32>} : memref<8x8x128xf32, #tpu.memory_space<vmem>>, vector<1x8x128xf32>,
    %c7_i32 = arith.constant 7 : i32
    %223 = arith.index_cast %c7_i32 : i32 to index
    %c0_83 = arith.constant 0 : index
    %c0_84 = arith.constant 0 : index
    %224 = vector.load %arg1[%223, %c0_83, %c0_84] : memref<8x8x128xf32, #tpu.memory_space<vmem>>, vector<1x8x128xf32>
    %225 = vector.shape_cast %224 : vector<1x8x128xf32> to vector<8x128xf32>
    %226 = arith.addf %218, %225 : vector<8x128xf32>
    %cst_85 = arith.constant dense<0.000000e+00> : vector<8x512xf32>
    %227 = tpu.matmul %226, %3, %cst_85 {dimension_numbers = #tpu.dot_dimension_numbers<[1], [0], [0], [1], [0, 0, 1, 1], [], []>} : vector<8x128xf32>, vector<128x512xf32>, vector<8x512xf32> -> vector<8x512xf32>
    %228 = math.tanh %227 : vector<8x512xf32>
    %229 = vector.extract_strided_slice %228 {offsets = [0, 0], sizes = [8, 128], strides = [1, 1]} : vector<8x512xf32> to vector<8x128xf32>
    %cst_86 = arith.constant 5.000000e-01 : f32
    %230 = vector.broadcast %cst_86 : f32 to vector<8x128xf32>
    %231 = arith.mulf %230, %229 : vector<8x128xf32>
    %cst_87 = arith.constant 5.000000e-01 : f32
    %232 = vector.broadcast %cst_87 : f32 to vector<8x128xf32>
    %233 = arith.addf %231, %232 : vector<8x128xf32>
    %234 = vector.extract_strided_slice %228 {offsets = [0, 128], sizes = [8, 128], strides = [1, 1]} : vector<8x512xf32> to vector<8x128xf32>
    %cst_88 = arith.constant 5.000000e-01 : f32
    %235 = vector.broadcast %cst_88 : f32 to vector<8x128xf32>
    %236 = arith.mulf %235, %234 : vector<8x128xf32>
    %cst_89 = arith.constant 5.000000e-01 : f32
    %237 = vector.broadcast %cst_89 : f32 to vector<8x128xf32>
    %238 = arith.addf %236, %237 : vector<8x128xf32>
    %239 = vector.extract_strided_slice %228 {offsets = [0, 256], sizes = [8, 128], strides = [1, 1]} : vector<8x512xf32> to vector<8x128xf32>
    %240 = vector.extract_strided_slice %228 {offsets = [0, 384], sizes = [8, 128], strides = [1, 1]} : vector<8x512xf32> to vector<8x128xf32>
    %cst_90 = arith.constant 5.000000e-01 : f32
    %241 = vector.broadcast %cst_90 : f32 to vector<8x128xf32>
    %242 = arith.mulf %241, %240 : vector<8x128xf32>
    %cst_91 = arith.constant 5.000000e-01 : f32
    %243 = vector.broadcast %cst_91 : f32 to vector<8x128xf32>
    %244 = arith.addf %242, %243 : vector<8x128xf32>
    %245 = arith.mulf %238, %216 : vector<8x128xf32>
    %246 = arith.mulf %233, %239 : vector<8x128xf32>
    %247 = arith.addf %245, %246 : vector<8x128xf32>
    %248 = math.tanh %247 : vector<8x128xf32>
    %249 = arith.mulf %244, %248 : vector<8x128xf32>
    %250 = arith.index_cast %c7_i32 : i32 to index
    %c0_92 = arith.constant 0 : index
    %c0_93 = arith.constant 0 : index
    %251 = vector.load %arg3[%250, %c0_92, %c0_93] : memref<8x8x128xf32, #tpu.memory_space<vmem>>, vector<1x8x128xf32>
    %252 = vector.shape_cast %251 : vector<1x8x128xf32> to vector<8x128xf32>
    %253 = vector.shape_cast %249 : vector<8x128xf32> to vector<1x8x128xf32>
    tpu.vector_store %arg3[%250, %c0_92, %c0_93], %253 {strides = array<i32>} : memref<8x8x128xf32, #tpu.memory_space<vmem>>, vector<1x8x128xf32>,
    %c8_i32 = arith.constant 8 : i32
    %c0_94 = arith.constant 0 : index
    %c0_95 = arith.constant 0 : index
    %254 = vector.load %arg4[%c0_94, %c0_95] : memref<8x128xf32, #tpu.memory_space<vmem>>, vector<8x128xf32>
    tpu.vector_store %arg4[%c0_94, %c0_95], %249 {strides = array<i32>} : memref<8x128xf32, #tpu.memory_space<vmem>>, vector<8x128xf32>,
    %c0_96 = arith.constant 0 : index
    %c0_97 = arith.constant 0 : index
    %255 = vector.load %arg5[%c0_96, %c0_97] : memref<8x128xf32, #tpu.memory_space<vmem>>, vector<8x128xf32>
    tpu.vector_store %arg5[%c0_96, %c0_97], %247 {strides = array<i32>} : memref<8x128xf32, #tpu.memory_space<vmem>>, vector<8x128xf32>,
    return
  }
  func.func @transform_0(%arg0: i32) -> (i32, i32, i32) {
    %c0_i32 = arith.constant 0 : i32
    %c0_i32_0 = arith.constant 0 : i32
    %c0_i32_1 = arith.constant 0 : i32
    return %arg0, %c0_i32, %c0_i32_0 : i32, i32, i32
  }
  func.func @transform_1(%arg0: i32) -> (i32, i32) {
    %c0_i32 = arith.constant 0 : i32
    %c0_i32_0 = arith.constant 0 : i32
    %c0_i32_1 = arith.constant 0 : i32
    return %c0_i32, %c0_i32_0 : i32, i32
  }
  func.func @transform_2(%arg0: i32) -> (i32, i32, i32) {
    %c0_i32 = arith.constant 0 : i32
    %c0_i32_0 = arith.constant 0 : i32
    %c0_i32_1 = arith.constant 0 : i32
    return %arg0, %c0_i32, %c0_i32_0 : i32, i32, i32
  }
}

</mosaic_0001>

<llo_original>
// kernel: lstm_model_forward.1
$region0: #{lstm_model_forward.1}
  #allocation0 [shape = 'u32[]', space=smem, size = 0x4, offset = 0x4, fixed_abs, tag = 'smem constant byte address 0x4 - core index']
  #allocation1 [shape = 'u32[144,128]{1,0:T(1,128)}', space=vmem, size = 0x12000, scoped, tag = 'internal scratch']
  #allocation2 [shape = 'f32[8,128]{1,0:T(8,128)}', space=vmem, size = 0x1000, scoped, tag = 'scratch operand']
  #allocation3 [shape = 'f32[8,128]{1,0:T(8,128)}', space=vmem, size = 0x1000, scoped, tag = 'scratch operand']
  %s0 = inlined_call_operand.vmem [shape: f32[8,8,128], index: 0, kind: input, shape index: {}]
  %s1 = inlined_call_operand.vmem [shape: f32[128,512], index: 1, kind: input, shape index: {}]
  %s2 = inlined_call_operand.vmem [shape: f32[8,8,128], index: 2, kind: output, shape index: {}]
  %s3 = sld [smem:[#allocation0]]
  $region22: #{lstm_model_forward.1} parent=0
    _
  %s5 = ssub.s32 1, %s3
  %s6 = scalar_select 0, %s5, %s3
  // Predicated region
  $region2: #{lstm_model_forward.1} parent=0 // pred_check
    _
  $region3: #{lstm_model_forward.1} parent=0 // pred_check_branch
    %8 = sbr.rel (0) target = $region5
  $region4: #{lstm_model_forward.1} parent=0 // pred_region
    _
  $region5: #{lstm_model_forward.1} parent=0 // pred_fallthru
    _
  // Predicated region
  $region6: #{lstm_model_forward.1} parent=0 // pred_check
    _
  $region7: #{lstm_model_forward.1} parent=0 // pred_check_branch
    %10 = sbr.rel (0) target = $region9
  $region8: #{lstm_model_forward.1} parent=0 // pred_region
    _
  $region9: #{lstm_model_forward.1} parent=0 // pred_fallthru
    _
  %p11 = scmp.eq.s32.totalorder 0, 0
  // Predicated region
  $region10: #{lstm_model_forward.1} parent=0 // pred_check
    %p12 = pneg %p11
  $region11: #{lstm_model_forward.1} parent=0 // pred_check_branch
    %14 = sbr.rel (%p12) target = $region13
  $region12: #{lstm_model_forward.1} parent=0 // pred_region
    %15 = vst [vmem:[#allocation2] sm:$0xff] 0.0
    %16 = vst [vmem:[#allocation3] sm:$0xff] 0.0
  $region13: #{lstm_model_forward.1} parent=0 // pred_fallthru
    _
  %v17 = vld [vmem:[%s1] sm:$0xff]
  %v18 = vld [vmem:[%s1 + $0x8] sm:$0xff]
  %v19 = vld [vmem:[%s1 + $0x10] sm:$0xff]
  %v20 = vld [vmem:[%s1 + $0x18] sm:$0xff]
  %v21 = vld [vmem:[%s1 + $0x20] sm:$0xff]
  %v22 = vld [vmem:[%s1 + $0x28] sm:$0xff]
  %v23 = vld [vmem:[%s1 + $0x30] sm:$0xff]
  %v24 = vld [vmem:[%s1 + $0x38] sm:$0xff]
  %v25 = vld [vmem:[%s1 + $0x40] sm:$0xff]
  %v26 = vld [vmem:[%s1 + $0x48] sm:$0xff]
  %v27 = vld [vmem:[%s1 + $0x50] sm:$0xff]
  %v28 = vld [vmem:[%s1 + $0x58] sm:$0xff]
  %v29 = vld [vmem:[%s1 + $0x60] sm:$0xff]
  %v30 = vld [vmem:[%s1 + $0x68] sm:$0xff]
  %v31 = vld [vmem:[%s1 + $0x70] sm:$0xff]
  %v32 = vld [vmem:[%s1 + $0x78] sm:$0xff]
  %v33 = vld [vmem:[%s1 + $0x80] sm:$0xff]
  %v34 = vld [vmem:[%s1 + $0x88] sm:$0xff]
  %v35 = vld [vmem:[%s1 + $0x90] sm:$0xff]
  %v36 = vld [vmem:[%s1 + $0x98] sm:$0xff]
  %v37 = vld [vmem:[%s1 + $0xa0] sm:$0xff]
  %v38 = vld [vmem:[%s1 + $0xa8] sm:$0xff]
  %v39 = vld [vmem:[%s1 + $0xb0] sm:$0xff]
  %v40 = vld [vmem:[%s1 + $0xb8] sm:$0xff]
  %v41 = vld [vmem:[%s1 + $0xc0] sm:$0xff]
  %v42 = vld [vmem:[%s1 + $0xc8] sm:$0xff]
  %v43 = vld [vmem:[%s1 + $0xd0] sm:$0xff]
  %v44 = vld [vmem:[%s1 + $0xd8] sm:$0xff]
  %v45 = vld [vmem:[%s1 + $0xe0] sm:$0xff]
  %v46 = vld [vmem:[%s1 + $0xe8] sm:$0xff]
  %v47 = vld [vmem:[%s1 + $0xf0] sm:$0xff]
  %v48 = vld [vmem:[%s1 + $0xf8] sm:$0xff]
  %v49 = vld [vmem:[%s1 + $0x100] sm:$0xff]
  %v50 = vld [vmem:[%s1 + $0x108] sm:$0xff]
  %v51 = vld [vmem:[%s1 + $0x110] sm:$0xff]
  %v52 = vld [vmem:[%s1 + $0x118] sm:$0xff]
  %v53 = vld [vmem:[%s1 + $0x120] sm:$0xff]
  %v54 = vld [vmem:[%s1 + $0x128] sm:$0xff]
  %v55 = vld [vmem:[%s1 + $0x130] sm:$0xff]
  %v56 = vld [vmem:[%s1 + $0x138] sm:$0xff]
  %v57 = vld [vmem:[%s1 + $0x140] sm:$0xff]
  %v58 = vld [vmem:[%s1 + $0x148] sm:$0xff]
  %v59 = vld [vmem:[%s1 + $0x150] sm:$0xff]
  %v60 = vld [vmem:[%s1 + $0x158] sm:$0xff]
  %v61 = vld [vmem:[%s1 + $0x160] sm:$0xff]
  %v62 = vld [vmem:[%s1 + $0x168] sm:$0xff]
  %v63 = vld [vmem:[%s1 + $0x170] sm:$0xff]
  %v64 = vld [vmem:[%s1 + $0x178] sm:$0xff]
  %v65 = vld [vmem:[%s1 + $0x180] sm:$0xff]
  %v66 = vld [vmem:[%s1 + $0x188] sm:$0xff]
  %v67 = vld [vmem:[%s1 + $0x190] sm:$0xff]
  %v68 = vld [vmem:[%s1 + $0x198] sm:$0xff]
  %v69 = vld [vmem:[%s1 + $0x1a0] sm:$0xff]
  %v70 = vld [vmem:[%s1 + $0x1a8] sm:$0xff]
  %v71 = vld [vmem:[%s1 + $0x1b0] sm:$0xff]
  %v72 = vld [vmem:[%s1 + $0x1b8] sm:$0xff]
  %v73 = vld [vmem:[%s1 + $0x1c0] sm:$0xff]
  %v74 = vld [vmem:[%s1 + $0x1c8] sm:$0xff]
  %v75 = vld [vmem:[%s1 + $0x1d0] sm:$0xff]
  %v76 = vld [vmem:[%s1 + $0x1d8] sm:$0xff]
  %v77 = vld [vmem:[%s1 + $0x1e0] sm:$0xff]
  %v78 = vld [vmem:[%s1 + $0x1e8] sm:$0xff]
  %v79 = vld [vmem:[%s1 + $0x1f0] sm:$0xff]
  %v80 = vld [vmem:[%s1 + $0x1f8] sm:$0xff]
  %v81 = vld [vmem:[#allocation2] sm:$0xff]
  %v82 = vld [vmem:[#allocation3] sm:$0xff]
  %v83 = vld [vmem:[%s0] sm:$0xff]
  %v84 = vadd.f32 %v81, %v83
  %85 = vmatprep.subr.mxu0 %v18
  %86 = vmatpush1.msra.mxu0 %v17
  %87 = vmatprep.subr.mxu0 %v22
  %88 = vmatpush1.msra.mxu0 %v21
  %89 = vmatprep.subr.mxu0 %v26
  %90 = vmatpush1.msra.mxu0 %v25
  %91 = vmatprep.subr.mxu0 %v30
  %92 = vmatpush1.msra.mxu0 %v29
  %93 = vmatprep.subr.mxu0 %v34
  %94 = vmatpush1.msra.mxu0 %v33
  %95 = vmatprep.subr.mxu0 %v38
  %96 = vmatpush1.msra.mxu0 %v37
  %97 = vmatprep.subr.mxu0 %v42
  %98 = vmatpush1.msra.mxu0 %v41
  %99 = vmatprep.subr.mxu0 %v46
  %100 = vmatpush1.msra.mxu0 %v45
  %101 = vmatprep.subr.mxu0 %v50
  %102 = vmatpush1.msra.mxu0 %v49
  %103 = vmatprep.subr.mxu0 %v54
  %104 = vmatpush1.msra.mxu0 %v53
  %105 = vmatprep.subr.mxu0 %v58
  %106 = vmatpush1.msra.mxu0 %v57
  %107 = vmatprep.subr.mxu0 %v62
  %108 = vmatpush1.msra.mxu0 %v61
  %109 = vmatprep.subr.mxu0 %v66
  %110 = vmatpush1.msra.mxu0 %v65
  %111 = vmatprep.subr.mxu0 %v70
  %112 = vmatpush1.msra.mxu0 %v69
  %113 = vmatprep.subr.mxu0 %v74
  %114 = vmatpush1.msra.mxu0 %v73
  %115 = vmatprep.subr.mxu0 %v78
  %116 = vmatpush1.msra.mxu0 %v77
  %117 = vmatprep.subr.mxu0 0.0
  %118 = vmatpush1.msra.mxu0 0.0
  %119 = vmatprep.subr.mxu0 0.0
  %120 = vmatpush1.msra.mxu0 0.0
  %121 = vmatprep.subr.mxu0 0.0
  %122 = vmatpush1.msra.mxu0 0.0
  %123 = vmatprep.subr.mxu0 0.0
  %124 = vmatpush1.msra.mxu0 0.0
  %125 = vmatprep.subr.mxu0 0.0
  %126 = vmatpush1.msra.mxu0 0.0
  %127 = vmatprep.subr.mxu0 0.0
  %128 = vmatpush1.msra.mxu0 0.0
  %129 = vmatprep.subr.mxu0 0.0
  %130 = vmatpush1.msra.mxu0 0.0
  %131 = vmatprep.subr.mxu0 0.0
  %132 = vmatpush1.msra.mxu0 0.0
  %133 = vmatprep.subr.mxu0 0.0
  %134 = vmatpush1.msra.mxu0 0.0
  %135 = vmatprep.subr.mxu0 0.0
  %136 = vmatpush1.msra.mxu0 0.0
  %137 = vmatprep.subr.mxu0 0.0
  %138 = vmatpush1.msra.mxu0 0.0
  %139 = vmatprep.subr.mxu0 0.0
  %140 = vmatpush1.msra.mxu0 0.0
  %141 = vmatprep.subr.mxu0 0.0
  %142 = vmatpush1.msra.mxu0 0.0
  %143 = vmatprep.subr.mxu0 0.0
  %144 = vmatpush1.msra.mxu0 0.0
  %145 = vmatprep.subr.mxu0 0.0
  %146 = vmatpush1.msra.mxu0 0.0
  %147 = vmatprep.subr.mxu0 0.0
  %148 = vmatpush1.msra.mxu0 0.0
  %149 = vmatprep.mubr.f32.mxu0 0.0
  %150 = vmatmul.mubr.f32.gmra.mrb[0].mxu0 %v84
  %v151 = vpop.f32.mrb[0].mxu0
  %v152 = vadd.f32 0.0, %v151
  %v153 = vpop.f32.mrb[0].mxu0
  %v154 = vadd.f32 0.0, %v153
  %155 = vdwg.mxu0
  %156 = vmatprep.subr.mxu0 %v20
  %157 = vmatpush1.msra.mxu0 %v19
  %158 = vmatprep.subr.mxu0 %v24
  %159 = vmatpush1.msra.mxu0 %v23
  %160 = vmatprep.subr.mxu0 %v28
  %161 = vmatpush1.msra.mxu0 %v27
  %162 = vmatprep.subr.mxu0 %v32
  %163 = vmatpush1.msra.mxu0 %v31
  %164 = vmatprep.subr.mxu0 %v36
  %165 = vmatpush1.msra.mxu0 %v35
  %166 = vmatprep.subr.mxu0 %v40
  %167 = vmatpush1.msra.mxu0 %v39
  %168 = vmatprep.subr.mxu0 %v44
  %169 = vmatpush1.msra.mxu0 %v43
  %170 = vmatprep.subr.mxu0 %v48
  %171 = vmatpush1.msra.mxu0 %v47
  %172 = vmatprep.subr.mxu0 %v52
  %173 = vmatpush1.msra.mxu0 %v51
  %174 = vmatprep.subr.mxu0 %v56
  %175 = vmatpush1.msra.mxu0 %v55
  %176 = vmatprep.subr.mxu0 %v60
  %177 = vmatpush1.msra.mxu0 %v59
  %178 = vmatprep.subr.mxu0 %v64
  %179 = vmatpush1.msra.mxu0 %v63
  %180 = vmatprep.subr.mxu0 %v68
  %181 = vmatpush1.msra.mxu0 %v67
  %182 = vmatprep.subr.mxu0 %v72
  %183 = vmatpush1.msra.mxu0 %v71
  %184 = vmatprep.subr.mxu0 %v76
  %185 = vmatpush1.msra.mxu0 %v75
  %186 = vmatprep.subr.mxu0 %v80
  %187 = vmatpush1.msra.mxu0 %v79
  %188 = vmatprep.subr.mxu0 0.0
  %189 = vmatpush1.msra.mxu0 0.0
  %190 = vmatprep.subr.mxu0 0.0
  %191 = vmatpush1.msra.mxu0 0.0
  %192 = vmatprep.subr.mxu0 0.0
  %193 = vmatpush1.msra.mxu0 0.0
  %194 = vmatprep.subr.mxu0 0.0
  %195 = vmatpush1.msra.mxu0 0.0
  %196 = vmatprep.subr.mxu0 0.0
  %197 = vmatpush1.msra.mxu0 0.0
  %198 = vmatprep.subr.mxu0 0.0
  %199 = vmatpush1.msra.mxu0 0.0
  %200 = vmatprep.subr.mxu0 0.0
  %201 = vmatpush1.msra.mxu0 0.0
  %202 = vmatprep.subr.mxu0 0.0
  %203 = vmatpush1.msra.mxu0 0.0
  %204 = vmatprep.subr.mxu0 0.0
  %205 = vmatpush1.msra.mxu0 0.0
  %206 = vmatprep.subr.mxu0 0.0
  %207 = vmatpush1.msra.mxu0 0.0
  %208 = vmatprep.subr.mxu0 0.0
  %209 = vmatpush1.msra.mxu0 0.0
  %210 = vmatprep.subr.mxu0 0.0
  %211 = vmatpush1.msra.mxu0 0.0
  %212 = vmatprep.subr.mxu0 0.0
  %213 = vmatpush1.msra.mxu0 0.0
  %214 = vmatprep.subr.mxu0 0.0
  %215 = vmatpush1.msra.mxu0 0.0
  %216 = vmatprep.subr.mxu0 0.0
  %217 = vmatpush1.msra.mxu0 0.0
  %218 = vmatprep.subr.mxu0 0.0
  %219 = vmatpush1.msra.mxu0 0.0
  %220 = vmatprep.mubr.f32.mxu0 0.0
  %221 = vmatmul.mubr.f32.gmra.mrb[0].mxu0 %v84
  %v222 = vpop.f32.mrb[0].mxu0
  %v223 = vadd.f32 0.0, %v222
  %v224 = vpop.f32.mrb[0].mxu0
  %v225 = vadd.f32 0.0, %v224
  %226 = vdwg.mxu0
  %v227 = vtanh.pop %v152
  %v228 = vtanh.pop %v154
  %v229 = vtanh.pop %v223
  %v230 = vtanh.pop %v225
  %v231 = vmul.f32 %v227, 0.5
  %v232 = vadd.f32 %v231, 0.5
  %v233 = vmul.f32 %v228, 0.5
  %v234 = vadd.f32 %v233, 0.5
  %v235 = vmul.f32 %v230, 0.5
  %v236 = vadd.f32 %v235, 0.5
  %v237 = vmul.f32 %v234, %v82
  %v238 = vmul.f32 %v232, %v229
  %v239 = vadd.f32 %v237, %v238
  %v240 = vtanh.pop %v239
  %v241 = vmul.f32 %v236, %v240
  %242 = vst [vmem:[%s2] sm:$0xff] %v241
  %s243 = scalar_lea.vmem %s0, 8
  %v244 = vld [vmem:[%s243] sm:$0xff]
  %v245 = vadd.f32 %v241, %v244
  %246 = vmatprep.subr.mxu0 %v18
  %247 = vmatpush1.msra.mxu0 %v17
  %248 = vmatprep.subr.mxu0 %v22
  %249 = vmatpush1.msra.mxu0 %v21
  %250 = vmatprep.subr.mxu0 %v26
  %251 = vmatpush1.msra.mxu0 %v25
  %252 = vmatprep.subr.mxu0 %v30
  %253 = vmatpush1.msra.mxu0 %v29
  %254 = vmatprep.subr.mxu0 %v34
  %255 = vmatpush1.msra.mxu0 %v33
  %256 = vmatprep.subr.mxu0 %v38
  %257 = vmatpush1.msra.mxu0 %v37
  %258 = vmatprep.subr.mxu0 %v42
  %259 = vmatpush1.msra.mxu0 %v41
  %260 = vmatprep.subr.mxu0 %v46
  %261 = vmatpush1.msra.mxu0 %v45
  %262 = vmatprep.subr.mxu0 %v50
  %263 = vmatpush1.msra.mxu0 %v49
  %264 = vmatprep.subr.mxu0 %v54
  %265 = vmatpush1.msra.mxu0 %v53
  %266 = vmatprep.subr.mxu0 %v58
  %267 = vmatpush1.msra.mxu0 %v57
  %268 = vmatprep.subr.mxu0 %v62
  %269 = vmatpush1.msra.mxu0 %v61
  %270 = vmatprep.subr.mxu0 %v66
  %271 = vmatpush1.msra.mxu0 %v65
  %272 = vmatprep.subr.mxu0 %v70
  %273 = vmatpush1.msra.mxu0 %v69
  %274 = vmatprep.subr.mxu0 %v74
  %275 = vmatpush1.msra.mxu0 %v73
  %276 = vmatprep.subr.mxu0 %v78
  %277 = vmatpush1.msra.mxu0 %v77
  %278 = vmatprep.subr.mxu0 0.0
  %279 = vmatpush1.msra.mxu0 0.0
  %280 = vmatprep.subr.mxu0 0.0
  %281 = vmatpush1.msra.mxu0 0.0
  %282 = vmatprep.subr.mxu0 0.0
  %283 = vmatpush1.msra.mxu0 0.0
  %284 = vmatprep.subr.mxu0 0.0
  %285 = vmatpush1.msra.mxu0 0.0
  %286 = vmatprep.subr.mxu0 0.0
  %287 = vmatpush1.msra.mxu0 0.0
  %288 = vmatprep.subr.mxu0 0.0
  %289 = vmatpush1.msra.mxu0 0.0
  %290 = vmatprep.subr.mxu0 0.0
  %291 = vmatpush1.msra.mxu0 0.0
  %292 = vmatprep.subr.mxu0 0.0
  %293 = vmatpush1.msra.mxu0 0.0
  %294 = vmatprep.subr.mxu0 0.0
  %295 = vmatpush1.msra.mxu0 0.0
  %296 = vmatprep.subr.mxu0 0.0
  %297 = vmatpush1.msra.mxu0 0.0
  %298 = vmatprep.subr.mxu0 0.0
  %299 = vmatpush1.msra.mxu0 0.0
  %300 = vmatprep.subr.mxu0 0.0
  %301 = vmatpush1.msra.mxu0 0.0
  %302 = vmatprep.subr.mxu0 0.0
  %303 = vmatpush1.msra.mxu0 0.0
  %304 = vmatprep.subr.mxu0 0.0
  %305 = vmatpush1.msra.mxu0 0.0
  %306 = vmatprep.subr.mxu0 0.0
  %307 = vmatpush1.msra.mxu0 0.0
  %308 = vmatprep.subr.mxu0 0.0
  %309 = vmatpush1.msra.mxu0 0.0
  %310 = vmatprep.mubr.f32.mxu0 0.0
  %311 = vmatmul.mubr.f32.gmra.mrb[0].mxu0 %v245
  %v312 = vpop.f32.mrb[0].mxu0
  %v313 = vadd.f32 0.0, %v312
  %v314 = vpop.f32.mrb[0].mxu0
  %v315 = vadd.f32 0.0, %v314
  %316 = vdwg.mxu0
  %317 = vmatprep.subr.mxu0 %v20
  %318 = vmatpush1.msra.mxu0 %v19
  %319 = vmatprep.subr.mxu0 %v24
  %320 = vmatpush1.msra.mxu0 %v23
  %321 = vmatprep.subr.mxu0 %v28
  %322 = vmatpush1.msra.mxu0 %v27
  %323 = vmatprep.subr.mxu0 %v32
  %324 = vmatpush1.msra.mxu0 %v31
  %325 = vmatprep.subr.mxu0 %v36
  %326 = vmatpush1.msra.mxu0 %v35
  %327 = vmatprep.subr.mxu0 %v40
  %328 = vmatpush1.msra.mxu0 %v39
  %329 = vmatprep.subr.mxu0 %v44
  %330 = vmatpush1.msra.mxu0 %v43
  %331 = vmatprep.subr.mxu0 %v48
  %332 = vmatpush1.msra.mxu0 %v47
  %333 = vmatprep.subr.mxu0 %v52
  %334 = vmatpush1.msra.mxu0 %v51
  %335 = vmatprep.subr.mxu0 %v56
  %336 = vmatpush1.msra.mxu0 %v55
  %337 = vmatprep.subr.mxu0 %v60
  %338 = vmatpush1.msra.mxu0 %v59
  %339 = vmatprep.subr.mxu0 %v64
  %340 = vmatpush1.msra.mxu0 %v63
  %341 = vmatprep.subr.mxu0 %v68
  %342 = vmatpush1.msra.mxu0 %v67
  %343 = vmatprep.subr.mxu0 %v72
  %344 = vmatpush1.msra.mxu0 %v71
  %345 = vmatprep.subr.mxu0 %v76
  %346 = vmatpush1.msra.mxu0 %v75
  %347 = vmatprep.subr.mxu0 %v80
  %348 = vmatpush1.msra.mxu0 %v79
  %349 = vmatprep.subr.mxu0 0.0
  %350 = vmatpush1.msra.mxu0 0.0
  %351 = vmatprep.subr.mxu0 0.0
  %352 = vmatpush1.msra.mxu0 0.0
  %353 = vmatprep.subr.mxu0 0.0
  %354 = vmatpush1.msra.mxu0 0.0
  %355 = vmatprep.subr.mxu0 0.0
  %356 = vmatpush1.msra.mxu0 0.0
  %357 = vmatprep.subr.mxu0 0.0
  %358 = vmatpush1.msra.mxu0 0.0
  %359 = vmatprep.subr.mxu0 0.0
  %360 = vmatpush1.msra.mxu0 0.0
  %361 = vmatprep.subr.mxu0 0.0
  %362 = vmatpush1.msra.mxu0 0.0
  %363 = vmatprep.subr.mxu0 0.0
  %364 = vmatpush1.msra.mxu0 0.0
  %365 = vmatprep.subr.mxu0 0.0
  %366 = vmatpush1.msra.mxu0 0.0
  %367 = vmatprep.subr.mxu0 0.0
  %368 = vmatpush1.msra.mxu0 0.0
  %369 = vmatprep.subr.mxu0 0.0
  %370 = vmatpush1.msra.mxu0 0.0
  %371 = vmatprep.subr.mxu0 0.0
  %372 = vmatpush1.msra.mxu0 0.0
  %373 = vmatprep.subr.mxu0 0.0
  %374 = vmatpush1.msra.mxu0 0.0
  %375 = vmatprep.subr.mxu0 0.0
  %376 = vmatpush1.msra.mxu0 0.0
  %377 = vmatprep.subr.mxu0 0.0
  %378 = vmatpush1.msra.mxu0 0.0
  %379 = vmatprep.subr.mxu0 0.0
  %380 = vmatpush1.msra.mxu0 0.0
  %381 = vmatprep.mubr.f32.mxu0 0.0
  %382 = vmatmul.mubr.f32.gmra.mrb[0].mxu0 %v245
  %v383 = vpop.f32.mrb[0].mxu0
  %v384 = vadd.f32 0.0, %v383
  %v385 = vpop.f32.mrb[0].mxu0
  %v386 = vadd.f32 0.0, %v385
  %387 = vdwg.mxu0
  %v388 = vtanh.pop %v313
  %v389 = vtanh.pop %v315
  %v390 = vtanh.pop %v384
  %v391 = vtanh.pop %v386
  %v392 = vmul.f32 %v388, 0.5
  %v393 = vadd.f32 %v392, 0.5
  %v394 = vmul.f32 %v389, 0.5
  %v395 = vadd.f32 %v394, 0.5
  %v396 = vmul.f32 %v391, 0.5
  %v397 = vadd.f32 %v396, 0.5
  %v398 = vmul.f32 %v395, %v239
  %v399 = vmul.f32 %v393, %v390
  %v400 = vadd.f32 %v398, %v399
  %v401 = vtanh.pop %v400
  %v402 = vmul.f32 %v397, %v401
  %s403 = scalar_lea.vmem %s2, 8
  %404 = vst [vmem:[%s403] sm:$0xff] %v402
  %s405 = scalar_lea.vmem %s0, 16
  %v406 = vld [vmem:[%s405] sm:$0xff]
  %v407 = vadd.f32 %v402, %v406
  %408 = vmatprep.subr.mxu0 %v18
  %409 = vmatpush1.msra.mxu0 %v17
  %410 = vmatprep.subr.mxu0 %v22
  %411 = vmatpush1.msra.mxu0 %v21
  %412 = vmatprep.subr.mxu0 %v26
  %413 = vmatpush1.msra.mxu0 %v25
  %414 = vmatprep.subr.mxu0 %v30
  %415 = vmatpush1.msra.mxu0 %v29
  %416 = vmatprep.subr.mxu0 %v34
  %417 = vmatpush1.msra.mxu0 %v33
  %418 = vmatprep.subr.mxu0 %v38
  %419 = vmatpush1.msra.mxu0 %v37
  %420 = vmatprep.subr.mxu0 %v42
  %421 = vmatpush1.msra.mxu0 %v41
  %422 = vmatprep.subr.mxu0 %v46
  %423 = vmatpush1.msra.mxu0 %v45
  %424 = vmatprep.subr.mxu0 %v50
  %425 = vmatpush1.msra.mxu0 %v49
  %426 = vmatprep.subr.mxu0 %v54
  %427 = vmatpush1.msra.mxu0 %v53
  %428 = vmatprep.subr.mxu0 %v58
  %429 = vmatpush1.msra.mxu0 %v57
  %430 = vmatprep.subr.mxu0 %v62
  %431 = vmatpush1.msra.mxu0 %v61
  %432 = vmatprep.subr.mxu0 %v66
  %433 = vmatpush1.msra.mxu0 %v65
  %434 = vmatprep.subr.mxu0 %v70
  %435 = vmatpush1.msra.mxu0 %v69
  %436 = vmatprep.subr.mxu0 %v74
  %437 = vmatpush1.msra.mxu0 %v73
  %438 = vmatprep.subr.mxu0 %v78
  %439 = vmatpush1.msra.mxu0 %v77
  %440 = vmatprep.subr.mxu0 0.0
  %441 = vmatpush1.msra.mxu0 0.0
  %442 = vmatprep.subr.mxu0 0.0
  %443 = vmatpush1.msra.mxu0 0.0
  %444 = vmatprep.subr.mxu0 0.0
  %445 = vmatpush1.msra.mxu0 0.0
  %446 = vmatprep.subr.mxu0 0.0
  %447 = vmatpush1.msra.mxu0 0.0
  %448 = vmatprep.subr.mxu0 0.0
  %449 = vmatpush1.msra.mxu0 0.0
  %450 = vmatprep.subr.mxu0 0.0
  %451 = vmatpush1.msra.mxu0 0.0
  %452 = vmatprep.subr.mxu0 0.0
  %453 = vmatpush1.msra.mxu0 0.0
  %454 = vmatprep.subr.mxu0 0.0
  %455 = vmatpush1.msra.mxu0 0.0
  %456 = vmatprep.subr.mxu0 0.0
  %457 = vmatpush1.msra.mxu0 0.0
  %458 = vmatprep.subr.mxu0 0.0
  %459 = vmatpush1.msra.mxu0 0.0
  %460 = vmatprep.subr.mxu0 0.0
  %461 = vmatpush1.msra.mxu0 0.0
  %462 = vmatprep.subr.mxu0 0.0
  %463 = vmatpush1.msra.mxu0 0.0
  %464 = vmatprep.subr.mxu0 0.0
  %465 = vmatpush1.msra.mxu0 0.0
  %466 = vmatprep.subr.mxu0 0.0
  %467 = vmatpush1.msra.mxu0 0.0
  %468 = vmatprep.subr.mxu0 0.0
  %469 = vmatpush1.msra.mxu0 0.0
  %470 = vmatprep.subr.mxu0 0.0
  %471 = vmatpush1.msra.mxu0 0.0
  %472 = vmatprep.mubr.f32.mxu0 0.0
  %473 = vmatmul.mubr.f32.gmra.mrb[0].mxu0 %v407
  %v474 = vpop.f32.mrb[0].mxu0
  %v475 = vadd.f32 0.0, %v474
  %v476 = vpop.f32.mrb[0].mxu0
  %v477 = vadd.f32 0.0, %v476
  %478 = vdwg.mxu0
  %479 = vmatprep.subr.mxu0 %v20
  %480 = vmatpush1.msra.mxu0 %v19
  %481 = vmatprep.subr.mxu0 %v24
  %482 = vmatpush1.msra.mxu0 %v23
  %483 = vmatprep.subr.mxu0 %v28
  %484 = vmatpush1.msra.mxu0 %v27
  %485 = vmatprep.subr.mxu0 %v32
  %486 = vmatpush1.msra.mxu0 %v31
  %487 = vmatprep.subr.mxu0 %v36
  %488 = vmatpush1.msra.mxu0 %v35
  %489 = vmatprep.subr.mxu0 %v40
  %490 = vmatpush1.msra.mxu0 %v39
  %491 = vmatprep.subr.mxu0 %v44
  %492 = vmatpush1.msra.mxu0 %v43
  %493 = vmatprep.subr.mxu0 %v48
  %494 = vmatpush1.msra.mxu0 %v47
  %495 = vmatprep.subr.mxu0 %v52
  %496 = vmatpush1.msra.mxu0 %v51
  %497 = vmatprep.subr.mxu0 %v56
  %498 = vmatpush1.msra.mxu0 %v55
  %499 = vmatprep.subr.mxu0 %v60
  %500 = vmatpush1.msra.mxu0 %v59
  %501 = vmatprep.subr.mxu0 %v64
  %502 = vmatpush1.msra.mxu0 %v63
  %503 = vmatprep.subr.mxu0 %v68
  %504 = vmatpush1.msra.mxu0 %v67
  %505 = vmatprep.subr.mxu0 %v72
  %506 = vmatpush1.msra.mxu0 %v71
  %507 = vmatprep.subr.mxu0 %v76
  %508 = vmatpush1.msra.mxu0 %v75
  %509 = vmatprep.subr.mxu0 %v80
  %510 = vmatpush1.msra.mxu0 %v79
  %511 = vmatprep.subr.mxu0 0.0
  %512 = vmatpush1.msra.mxu0 0.0
  %513 = vmatprep.subr.mxu0 0.0
  %514 = vmatpush1.msra.mxu0 0.0
  %515 = vmatprep.subr.mxu0 0.0
  %516 = vmatpush1.msra.mxu0 0.0
  %517 = vmatprep.subr.mxu0 0.0
  %518 = vmatpush1.msra.mxu0 0.0
  %519 = vmatprep.subr.mxu0 0.0
  %520 = vmatpush1.msra.mxu0 0.0
  %521 = vmatprep.subr.mxu0 0.0
  %522 = vmatpush1.msra.mxu0 0.0
  %523 = vmatprep.subr.mxu0 0.0
  %524 = vmatpush1.msra.mxu0 0.0
  %525 = vmatprep.subr.mxu0 0.0
  %526 = vmatpush1.msra.mxu0 0.0
  %527 = vmatprep.subr.mxu0 0.0
  %528 = vmatpush1.msra.mxu0 0.0
  %529 = vmatprep.subr.mxu0 0.0
  %530 = vmatpush1.msra.mxu0 0.0
  %531 = vmatprep.subr.mxu0 0.0
  %532 = vmatpush1.msra.mxu0 0.0
  %533 = vmatprep.subr.mxu0 0.0
  %534 = vmatpush1.msra.mxu0 0.0
  %535 = vmatprep.subr.mxu0 0.0
  %536 = vmatpush1.msra.mxu0 0.0
  %537 = vmatprep.subr.mxu0 0.0
  %538 = vmatpush1.msra.mxu0 0.0
  %539 = vmatprep.subr.mxu0 0.0
  %540 = vmatpush1.msra.mxu0 0.0
  %541 = vmatprep.subr.mxu0 0.0
  %542 = vmatpush1.msra.mxu0 0.0
  %543 = vmatprep.mubr.f32.mxu0 0.0
  %544 = vmatmul.mubr.f32.gmra.mrb[0].mxu0 %v407
  %v545 = vpop.f32.mrb[0].mxu0
  %v546 = vadd.f32 0.0, %v545
  %v547 = vpop.f32.mrb[0].mxu0
  %v548 = vadd.f32 0.0, %v547
  %549 = vdwg.mxu0
  %v550 = vtanh.pop %v475
  %v551 = vtanh.pop %v477
  %v552 = vtanh.pop %v546
  %v553 = vtanh.pop %v548
  %v554 = vmul.f32 %v550, 0.5
  %v555 = vadd.f32 %v554, 0.5
  %v556 = vmul.f32 %v551, 0.5
  %v557 = vadd.f32 %v556, 0.5
  %v558 = vmul.f32 %v553, 0.5
  %v559 = vadd.f32 %v558, 0.5
  %v560 = vmul.f32 %v557, %v400
  %v561 = vmul.f32 %v555, %v552
  %v562 = vadd.f32 %v560, %v561
  %v563 = vtanh.pop %v562
  %v564 = vmul.f32 %v559, %v563
  %s565 = scalar_lea.vmem %s2, 16
  %566 = vst [vmem:[%s565] sm:$0xff] %v564
  %s567 = scalar_lea.vmem %s0, 24
  %v568 = vld [vmem:[%s567] sm:$0xff]
  %v569 = vadd.f32 %v564, %v568
  %570 = vmatprep.subr.mxu0 %v18
  %571 = vmatpush1.msra.mxu0 %v17
  %572 = vmatprep.subr.mxu0 %v22
  %573 = vmatpush1.msra.mxu0 %v21
  %574 = vmatprep.subr.mxu0 %v26
  %575 = vmatpush1.msra.mxu0 %v25
  %576 = vmatprep.subr.mxu0 %v30
  %577 = vmatpush1.msra.mxu0 %v29
  %578 = vmatprep.subr.mxu0 %v34
  %579 = vmatpush1.msra.mxu0 %v33
  %580 = vmatprep.subr.mxu0 %v38
  %581 = vmatpush1.msra.mxu0 %v37
  %582 = vmatprep.subr.mxu0 %v42
  %583 = vmatpush1.msra.mxu0 %v41
  %584 = vmatprep.subr.mxu0 %v46
  %585 = vmatpush1.msra.mxu0 %v45
  %586 = vmatprep.subr.mxu0 %v50
  %587 = vmatpush1.msra.mxu0 %v49
  %588 = vmatprep.subr.mxu0 %v54
  %589 = vmatpush1.msra.mxu0 %v53
  %590 = vmatprep.subr.mxu0 %v58
  %591 = vmatpush1.msra.mxu0 %v57
  %592 = vmatprep.subr.mxu0 %v62
  %593 = vmatpush1.msra.mxu0 %v61
  %594 = vmatprep.subr.mxu0 %v66
  %595 = vmatpush1.msra.mxu0 %v65
  %596 = vmatprep.subr.mxu0 %v70
  %597 = vmatpush1.msra.mxu0 %v69
  %598 = vmatprep.subr.mxu0 %v74
  %599 = vmatpush1.msra.mxu0 %v73
  %600 = vmatprep.subr.mxu0 %v78
  %601 = vmatpush1.msra.mxu0 %v77
  %602 = vmatprep.subr.mxu0 0.0
  %603 = vmatpush1.msra.mxu0 0.0
  %604 = vmatprep.subr.mxu0 0.0
  %605 = vmatpush1.msra.mxu0 0.0
  %606 = vmatprep.subr.mxu0 0.0
  %607 = vmatpush1.msra.mxu0 0.0
  %608 = vmatprep.subr.mxu0 0.0
  %609 = vmatpush1.msra.mxu0 0.0
  %610 = vmatprep.subr.mxu0 0.0
  %611 = vmatpush1.msra.mxu0 0.0
  %612 = vmatprep.subr.mxu0 0.0
  %613 = vmatpush1.msra.mxu0 0.0
  %614 = vmatprep.subr.mxu0 0.0
  %615 = vmatpush1.msra.mxu0 0.0
  %616 = vmatprep.subr.mxu0 0.0
  %617 = vmatpush1.msra.mxu0 0.0
  %618 = vmatprep.subr.mxu0 0.0
  %619 = vmatpush1.msra.mxu0 0.0
  %620 = vmatprep.subr.mxu0 0.0
  %621 = vmatpush1.msra.mxu0 0.0
  %622 = vmatprep.subr.mxu0 0.0
  %623 = vmatpush1.msra.mxu0 0.0
  %624 = vmatprep.subr.mxu0 0.0
  %625 = vmatpush1.msra.mxu0 0.0
  %626 = vmatprep.subr.mxu0 0.0
  %627 = vmatpush1.msra.mxu0 0.0
  %628 = vmatprep.subr.mxu0 0.0
  %629 = vmatpush1.msra.mxu0 0.0
  %630 = vmatprep.subr.mxu0 0.0
  %631 = vmatpush1.msra.mxu0 0.0
  %632 = vmatprep.subr.mxu0 0.0
  %633 = vmatpush1.msra.mxu0 0.0
  %634 = vmatprep.mubr.f32.mxu0 0.0
  %635 = vmatmul.mubr.f32.gmra.mrb[0].mxu0 %v569
  %v636 = vpop.f32.mrb[0].mxu0
  %v637 = vadd.f32 0.0, %v636
  %v638 = vpop.f32.mrb[0].mxu0
  %v639 = vadd.f32 0.0, %v638
  %640 = vdwg.mxu0
  %641 = vmatprep.subr.mxu0 %v20
  %642 = vmatpush1.msra.mxu0 %v19
  %643 = vmatprep.subr.mxu0 %v24
  %644 = vmatpush1.msra.mxu0 %v23
  %645 = vmatprep.subr.mxu0 %v28
  %646 = vmatpush1.msra.mxu0 %v27
  %647 = vmatprep.subr.mxu0 %v32
  %648 = vmatpush1.msra.mxu0 %v31
  %649 = vmatprep.subr.mxu0 %v36
  %650 = vmatpush1.msra.mxu0 %v35
  %651 = vmatprep.subr.mxu0 %v40
  %652 = vmatpush1.msra.mxu0 %v39
  %653 = vmatprep.subr.mxu0 %v44
  %654 = vmatpush1.msra.mxu0 %v43
  %655 = vmatprep.subr.mxu0 %v48
  %656 = vmatpush1.msra.mxu0 %v47
  %657 = vmatprep.subr.mxu0 %v52
  %658 = vmatpush1.msra.mxu0 %v51
  %659 = vmatprep.subr.mxu0 %v56
  %660 = vmatpush1.msra.mxu0 %v55
  %661 = vmatprep.subr.mxu0 %v60
  %662 = vmatpush1.msra.mxu0 %v59
  %663 = vmatprep.subr.mxu0 %v64
  %664 = vmatpush1.msra.mxu0 %v63
  %665 = vmatprep.subr.mxu0 %v68
  %666 = vmatpush1.msra.mxu0 %v67
  %667 = vmatprep.subr.mxu0 %v72
  %668 = vmatpush1.msra.mxu0 %v71
  %669 = vmatprep.subr.mxu0 %v76
  %670 = vmatpush1.msra.mxu0 %v75
  %671 = vmatprep.subr.mxu0 %v80
  %672 = vmatpush1.msra.mxu0 %v79
  %673 = vmatprep.subr.mxu0 0.0
  %674 = vmatpush1.msra.mxu0 0.0
  %675 = vmatprep.subr.mxu0 0.0
  %676 = vmatpush1.msra.mxu0 0.0
  %677 = vmatprep.subr.mxu0 0.0
  %678 = vmatpush1.msra.mxu0 0.0
  %679 = vmatprep.subr.mxu0 0.0
  %680 = vmatpush1.msra.mxu0 0.0
  %681 = vmatprep.subr.mxu0 0.0
  %682 = vmatpush1.msra.mxu0 0.0
  %683 = vmatprep.subr.mxu0 0.0
  %684 = vmatpush1.msra.mxu0 0.0
  %685 = vmatprep.subr.mxu0 0.0
  %686 = vmatpush1.msra.mxu0 0.0
  %687 = vmatprep.subr.mxu0 0.0
  %688 = vmatpush1.msra.mxu0 0.0
  %689 = vmatprep.subr.mxu0 0.0
  %690 = vmatpush1.msra.mxu0 0.0
  %691 = vmatprep.subr.mxu0 0.0
  %692 = vmatpush1.msra.mxu0 0.0
  %693 = vmatprep.subr.mxu0 0.0
  %694 = vmatpush1.msra.mxu0 0.0
  %695 = vmatprep.subr.mxu0 0.0
  %696 = vmatpush1.msra.mxu0 0.0
  %697 = vmatprep.subr.mxu0 0.0
  %698 = vmatpush1.msra.mxu0 0.0
  %699 = vmatprep.subr.mxu0 0.0
  %700 = vmatpush1.msra.mxu0 0.0
  %701 = vmatprep.subr.mxu0 0.0
  %702 = vmatpush1.msra.mxu0 0.0
  %703 = vmatprep.subr.mxu0 0.0
  %704 = vmatpush1.msra.mxu0 0.0
  %705 = vmatprep.mubr.f32.mxu0 0.0
  %706 = vmatmul.mubr.f32.gmra.mrb[0].mxu0 %v569
  %v707 = vpop.f32.mrb[0].mxu0
  %v708 = vadd.f32 0.0, %v707
  %v709 = vpop.f32.mrb[0].mxu0
  %v710 = vadd.f32 0.0, %v709
  %711 = vdwg.mxu0
  %v712 = vtanh.pop %v637
  %v713 = vtanh.pop %v639
  %v714 = vtanh.pop %v708
  %v715 = vtanh.pop %v710
  %v716 = vmul.f32 %v712, 0.5
  %v717 = vadd.f32 %v716, 0.5
  %v718 = vmul.f32 %v713, 0.5
  %v719 = vadd.f32 %v718, 0.5
  %v720 = vmul.f32 %v715, 0.5
  %v721 = vadd.f32 %v720, 0.5
  %v722 = vmul.f32 %v719, %v562
  %v723 = vmul.f32 %v717, %v714
  %v724 = vadd.f32 %v722, %v723
  %v725 = vtanh.pop %v724
  %v726 = vmul.f32 %v721, %v725
  %s727 = scalar_lea.vmem %s2, 24
  %728 = vst [vmem:[%s727] sm:$0xff] %v726
  %s729 = scalar_lea.vmem %s0, 32
  %v730 = vld [vmem:[%s729] sm:$0xff]
  %v731 = vadd.f32 %v726, %v730
  %732 = vmatprep.subr.mxu0 %v18
  %733 = vmatpush1.msra.mxu0 %v17
  %734 = vmatprep.subr.mxu0 %v22
  %735 = vmatpush1.msra.mxu0 %v21
  %736 = vmatprep.subr.mxu0 %v26
  %737 = vmatpush1.msra.mxu0 %v25
  %738 = vmatprep.subr.mxu0 %v30
  %739 = vmatpush1.msra.mxu0 %v29
  %740 = vmatprep.subr.mxu0 %v34
  %741 = vmatpush1.msra.mxu0 %v33
  %742 = vmatprep.subr.mxu0 %v38
  %743 = vmatpush1.msra.mxu0 %v37
  %744 = vmatprep.subr.mxu0 %v42
  %745 = vmatpush1.msra.mxu0 %v41
  %746 = vmatprep.subr.mxu0 %v46
  %747 = vmatpush1.msra.mxu0 %v45
  %748 = vmatprep.subr.mxu0 %v50
  %749 = vmatpush1.msra.mxu0 %v49
  %750 = vmatprep.subr.mxu0 %v54
  %751 = vmatpush1.msra.mxu0 %v53
  %752 = vmatprep.subr.mxu0 %v58
  %753 = vmatpush1.msra.mxu0 %v57
  %754 = vmatprep.subr.mxu0 %v62
  %755 = vmatpush1.msra.mxu0 %v61
  %756 = vmatprep.subr.mxu0 %v66
  %757 = vmatpush1.msra.mxu0 %v65
  %758 = vmatprep.subr.mxu0 %v70
  %759 = vmatpush1.msra.mxu0 %v69
  %760 = vmatprep.subr.mxu0 %v74
  %761 = vmatpush1.msra.mxu0 %v73
  %762 = vmatprep.subr.mxu0 %v78
  %763 = vmatpush1.msra.mxu0 %v77
  %764 = vmatprep.subr.mxu0 0.0
  %765 = vmatpush1.msra.mxu0 0.0
  %766 = vmatprep.subr.mxu0 0.0
  %767 = vmatpush1.msra.mxu0 0.0
  %768 = vmatprep.subr.mxu0 0.0
  %769 = vmatpush1.msra.mxu0 0.0
  %770 = vmatprep.subr.mxu0 0.0
  %771 = vmatpush1.msra.mxu0 0.0
  %772 = vmatprep.subr.mxu0 0.0
  %773 = vmatpush1.msra.mxu0 0.0
  %774 = vmatprep.subr.mxu0 0.0
  %775 = vmatpush1.msra.mxu0 0.0
  %776 = vmatprep.subr.mxu0 0.0
  %777 = vmatpush1.msra.mxu0 0.0
  %778 = vmatprep.subr.mxu0 0.0
  %779 = vmatpush1.msra.mxu0 0.0
  %780 = vmatprep.subr.mxu0 0.0
  %781 = vmatpush1.msra.mxu0 0.0
  %782 = vmatprep.subr.mxu0 0.0
  %783 = vmatpush1.msra.mxu0 0.0
  %784 = vmatprep.subr.mxu0 0.0
  %785 = vmatpush1.msra.mxu0 0.0
  %786 = vmatprep.subr.mxu0 0.0
  %787 = vmatpush1.msra.mxu0 0.0
  %788 = vmatprep.subr.mxu0 0.0
  %789 = vmatpush1.msra.mxu0 0.0
  %790 = vmatprep.subr.mxu0 0.0
  %791 = vmatpush1.msra.mxu0 0.0
  %792 = vmatprep.subr.mxu0 0.0
  %793 = vmatpush1.msra.mxu0 0.0
  %794 = vmatprep.subr.mxu0 0.0
  %795 = vmatpush1.msra.mxu0 0.0
  %796 = vmatprep.mubr.f32.mxu0 0.0
  %797 = vmatmul.mubr.f32.gmra.mrb[0].mxu0 %v731
  %v798 = vpop.f32.mrb[0].mxu0
  %v799 = vadd.f32 0.0, %v798
  %v800 = vpop.f32.mrb[0].mxu0
  %v801 = vadd.f32 0.0, %v800
  %802 = vdwg.mxu0
  %803 = vmatprep.subr.mxu0 %v20
  %804 = vmatpush1.msra.mxu0 %v19
  %805 = vmatprep.subr.mxu0 %v24
  %806 = vmatpush1.msra.mxu0 %v23
  %807 = vmatprep.subr.mxu0 %v28
  %808 = vmatpush1.msra.mxu0 %v27
  %809 = vmatprep.subr.mxu0 %v32
  %810 = vmatpush1.msra.mxu0 %v31
  %811 = vmatprep.subr.mxu0 %v36
  %812 = vmatpush1.msra.mxu0 %v35
  %813 = vmatprep.subr.mxu0 %v40
  %814 = vmatpush1.msra.mxu0 %v39
  %815 = vmatprep.subr.mxu0 %v44
  %816 = vmatpush1.msra.mxu0 %v43
  %817 = vmatprep.subr.mxu0 %v48
  %818 = vmatpush1.msra.mxu0 %v47
  %819 = vmatprep.subr.mxu0 %v52
  %820 = vmatpush1.msra.mxu0 %v51
  %821 = vmatprep.subr.mxu0 %v56
  %822 = vmatpush1.msra.mxu0 %v55
  %823 = vmatprep.subr.mxu0 %v60
  %824 = vmatpush1.msra.mxu0 %v59
  %825 = vmatprep.subr.mxu0 %v64
  %826 = vmatpush1.msra.mxu0 %v63
  %827 = vmatprep.subr.mxu0 %v68
  %828 = vmatpush1.msra.mxu0 %v67
  %829 = vmatprep.subr.mxu0 %v72
  %830 = vmatpush1.msra.mxu0 %v71
  %831 = vmatprep.subr.mxu0 %v76
  %832 = vmatpush1.msra.mxu0 %v75
  %833 = vmatprep.subr.mxu0 %v80
  %834 = vmatpush1.msra.mxu0 %v79
  %835 = vmatprep.subr.mxu0 0.0
  %836 = vmatpush1.msra.mxu0 0.0
  %837 = vmatprep.subr.mxu0 0.0
  %838 = vmatpush1.msra.mxu0 0.0
  %839 = vmatprep.subr.mxu0 0.0
  %840 = vmatpush1.msra.mxu0 0.0
  %841 = vmatprep.subr.mxu0 0.0
  %842 = vmatpush1.msra.mxu0 0.0
  %843 = vmatprep.subr.mxu0 0.0
  %844 = vmatpush1.msra.mxu0 0.0
  %845 = vmatprep.subr.mxu0 0.0
  %846 = vmatpush1.msra.mxu0 0.0
  %847 = vmatprep.subr.mxu0 0.0
  %848 = vmatpush1.msra.mxu0 0.0
  %849 = vmatprep.subr.mxu0 0.0
  %850 = vmatpush1.msra.mxu0 0.0
  %851 = vmatprep.subr.mxu0 0.0
  %852 = vmatpush1.msra.mxu0 0.0
  %853 = vmatprep.subr.mxu0 0.0
  %854 = vmatpush1.msra.mxu0 0.0
  %855 = vmatprep.subr.mxu0 0.0
  %856 = vmatpush1.msra.mxu0 0.0
  %857 = vmatprep.subr.mxu0 0.0
  %858 = vmatpush1.msra.mxu0 0.0
  %859 = vmatprep.subr.mxu0 0.0
  %860 = vmatpush1.msra.mxu0 0.0
  %861 = vmatprep.subr.mxu0 0.0
  %862 = vmatpush1.msra.mxu0 0.0
  %863 = vmatprep.subr.mxu0 0.0
  %864 = vmatpush1.msra.mxu0 0.0
  %865 = vmatprep.subr.mxu0 0.0
  %866 = vmatpush1.msra.mxu0 0.0
  %867 = vmatprep.mubr.f32.mxu0 0.0
  %868 = vmatmul.mubr.f32.gmra.mrb[0].mxu0 %v731
  %v869 = vpop.f32.mrb[0].mxu0
  %v870 = vadd.f32 0.0, %v869
  %v871 = vpop.f32.mrb[0].mxu0
  %v872 = vadd.f32 0.0, %v871
  %873 = vdwg.mxu0
  %v874 = vtanh.pop %v799
  %v875 = vtanh.pop %v801
  %v876 = vtanh.pop %v870
  %v877 = vtanh.pop %v872
  %v878 = vmul.f32 %v874, 0.5
  %v879 = vadd.f32 %v878, 0.5
  %v880 = vmul.f32 %v875, 0.5
  %v881 = vadd.f32 %v880, 0.5
  %v882 = vmul.f32 %v877, 0.5
  %v883 = vadd.f32 %v882, 0.5
  %v884 = vmul.f32 %v881, %v724
  %v885 = vmul.f32 %v879, %v876
  %v886 = vadd.f32 %v884, %v885
  %v887 = vtanh.pop %v886
  %v888 = vmul.f32 %v883, %v887
  %s889 = scalar_lea.vmem %s2, 32
  %890 = vst [vmem:[%s889] sm:$0xff] %v888
  %s891 = scalar_lea.vmem %s0, 40
  %v892 = vld [vmem:[%s891] sm:$0xff]
  %v893 = vadd.f32 %v888, %v892
  %894 = vmatprep.subr.mxu0 %v18
  %895 = vmatpush1.msra.mxu0 %v17
  %896 = vmatprep.subr.mxu0 %v22
  %897 = vmatpush1.msra.mxu0 %v21
  %898 = vmatprep.subr.mxu0 %v26
  %899 = vmatpush1.msra.mxu0 %v25
  %900 = vmatprep.subr.mxu0 %v30
  %901 = vmatpush1.msra.mxu0 %v29
  %902 = vmatprep.subr.mxu0 %v34
  %903 = vmatpush1.msra.mxu0 %v33
  %904 = vmatprep.subr.mxu0 %v38
  %905 = vmatpush1.msra.mxu0 %v37
  %906 = vmatprep.subr.mxu0 %v42
  %907 = vmatpush1.msra.mxu0 %v41
  %908 = vmatprep.subr.mxu0 %v46
  %909 = vmatpush1.msra.mxu0 %v45
  %910 = vmatprep.subr.mxu0 %v50
  %911 = vmatpush1.msra.mxu0 %v49
  %912 = vmatprep.subr.mxu0 %v54
  %913 = vmatpush1.msra.mxu0 %v53
  %914 = vmatprep.subr.mxu0 %v58
  %915 = vmatpush1.msra.mxu0 %v57
  %916 = vmatprep.subr.mxu0 %v62
  %917 = vmatpush1.msra.mxu0 %v61
  %918 = vmatprep.subr.mxu0 %v66
  %919 = vmatpush1.msra.mxu0 %v65
  %920 = vmatprep.subr.mxu0 %v70
  %921 = vmatpush1.msra.mxu0 %v69
  %922 = vmatprep.subr.mxu0 %v74
  %923 = vmatpush1.msra.mxu0 %v73
  %924 = vmatprep.subr.mxu0 %v78
  %925 = vmatpush1.msra.mxu0 %v77
  %926 = vmatprep.subr.mxu0 0.0
  %927 = vmatpush1.msra.mxu0 0.0
  %928 = vmatprep.subr.mxu0 0.0
  %929 = vmatpush1.msra.mxu0 0.0
  %930 = vmatprep.subr.mxu0 0.0
  %931 = vmatpush1.msra.mxu0 0.0
  %932 = vmatprep.subr.mxu0 0.0
  %933 = vmatpush1.msra.mxu0 0.0
  %934 = vmatprep.subr.mxu0 0.0
  %935 = vmatpush1.msra.mxu0 0.0
  %936 = vmatprep.subr.mxu0 0.0
  %937 = vmatpush1.msra.mxu0 0.0
  %938 = vmatprep.subr.mxu0 0.0
  %939 = vmatpush1.msra.mxu0 0.0
  %940 = vmatprep.subr.mxu0 0.0
  %941 = vmatpush1.msra.mxu0 0.0
  %942 = vmatprep.subr.mxu0 0.0
  %943 = vmatpush1.msra.mxu0 0.0
  %944 = vmatprep.subr.mxu0 0.0
  %945 = vmatpush1.msra.mxu0 0.0
  %946 = vmatprep.subr.mxu0 0.0
  %947 = vmatpush1.msra.mxu0 0.0
  %948 = vmatprep.subr.mxu0 0.0
  %949 = vmatpush1.msra.mxu0 0.0
  %950 = vmatprep.subr.mxu0 0.0
  %951 = vmatpush1.msra.mxu0 0.0
  %952 = vmatprep.subr.mxu0 0.0
  %953 = vmatpush1.msra.mxu0 0.0
  %954 = vmatprep.subr.mxu0 0.0
  %955 = vmatpush1.msra.mxu0 0.0
  %956 = vmatprep.subr.mxu0 0.0
  %957 = vmatpush1.msra.mxu0 0.0
  %958 = vmatprep.mubr.f32.mxu0 0.0
  %959 = vmatmul.mubr.f32.gmra.mrb[0].mxu0 %v893
  %v960 = vpop.f32.mrb[0].mxu0
  %v961 = vadd.f32 0.0, %v960
  %v962 = vpop.f32.mrb[0].mxu0
  %v963 = vadd.f32 0.0, %v962
  %964 = vdwg.mxu0
  %965 = vmatprep.subr.mxu0 %v20
  %966 = vmatpush1.msra.mxu0 %v19
  %967 = vmatprep.subr.mxu0 %v24
  %968 = vmatpush1.msra.mxu0 %v23
  %969 = vmatprep.subr.mxu0 %v28
  %970 = vmatpush1.msra.mxu0 %v27
  %971 = vmatprep.subr.mxu0 %v32
  %972 = vmatpush1.msra.mxu0 %v31
  %973 = vmatprep.subr.mxu0 %v36
  %974 = vmatpush1.msra.mxu0 %v35
  %975 = vmatprep.subr.mxu0 %v40
  %976 = vmatpush1.msra.mxu0 %v39
  %977 = vmatprep.subr.mxu0 %v44
  %978 = vmatpush1.msra.mxu0 %v43
  %979 = vmatprep.subr.mxu0 %v48
  %980 = vmatpush1.msra.mxu0 %v47
  %981 = vmatprep.subr.mxu0 %v52
  %982 = vmatpush1.msra.mxu0 %v51
  %983 = vmatprep.subr.mxu0 %v56
  %984 = vmatpush1.msra.mxu0 %v55
  %985 = vmatprep.subr.mxu0 %v60
  %986 = vmatpush1.msra.mxu0 %v59
  %987 = vmatprep.subr.mxu0 %v64
  %988 = vmatpush1.msra.mxu0 %v63
  %989 = vmatprep.subr.mxu0 %v68
  %990 = vmatpush1.msra.mxu0 %v67
  %991 = vmatprep.subr.mxu0 %v72
  %992 = vmatpush1.msra.mxu0 %v71
  %993 = vmatprep.subr.mxu0 %v76
  %994 = vmatpush1.msra.mxu0 %v75
  %995 = vmatprep.subr.mxu0 %v80
  %996 = vmatpush1.msra.mxu0 %v79
  %997 = vmatprep.subr.mxu0 0.0
  %998 = vmatpush1.msra.mxu0 0.0
  %999 = vmatprep.subr.mxu0 0.0
  %1000 = vmatpush1.msra.mxu0 0.0
  %1001 = vmatprep.subr.mxu0 0.0
  %1002 = vmatpush1.msra.mxu0 0.0
  %1003 = vmatprep.subr.mxu0 0.0
  %1004 = vmatpush1.msra.mxu0 0.0
  %1005 = vmatprep.subr.mxu0 0.0
  %1006 = vmatpush1.msra.mxu0 0.0
  %1007 = vmatprep.subr.mxu0 0.0
  %1008 = vmatpush1.msra.mxu0 0.0
  %1009 = vmatprep.subr.mxu0 0.0
  %1010 = vmatpush1.msra.mxu0 0.0
  %1011 = vmatprep.subr.mxu0 0.0
  %1012 = vmatpush1.msra.mxu0 0.0
  %1013 = vmatprep.subr.mxu0 0.0
  %1014 = vmatpush1.msra.mxu0 0.0
  %1015 = vmatprep.subr.mxu0 0.0
  %1016 = vmatpush1.msra.mxu0 0.0
  %1017 = vmatprep.subr.mxu0 0.0
  %1018 = vmatpush1.msra.mxu0 0.0
  %1019 = vmatprep.subr.mxu0 0.0
  %1020 = vmatpush1.msra.mxu0 0.0
  %1021 = vmatprep.subr.mxu0 0.0
  %1022 = vmatpush1.msra.mxu0 0.0
  %1023 = vmatprep.subr.mxu0 0.0
  %1024 = vmatpush1.msra.mxu0 0.0
  %1025 = vmatprep.subr.mxu0 0.0
  %1026 = vmatpush1.msra.mxu0 0.0
  %1027 = vmatprep.subr.mxu0 0.0
  %1028 = vmatpush1.msra.mxu0 0.0
  %1029 = vmatprep.mubr.f32.mxu0 0.0
  %1030 = vmatmul.mubr.f32.gmra.mrb[0].mxu0 %v893
  %v1031 = vpop.f32.mrb[0].mxu0
  %v1032 = vadd.f32 0.0, %v1031
  %v1033 = vpop.f32.mrb[0].mxu0
  %v1034 = vadd.f32 0.0, %v1033
  %1035 = vdwg.mxu0
  %v1036 = vtanh.pop %v961
  %v1037 = vtanh.pop %v963
  %v1038 = vtanh.pop %v1032
  %v1039 = vtanh.pop %v1034
  %v1040 = vmul.f32 %v1036, 0.5
  %v1041 = vadd.f32 %v1040, 0.5
  %v1042 = vmul.f32 %v1037, 0.5
  %v1043 = vadd.f32 %v1042, 0.5
  %v1044 = vmul.f32 %v1039, 0.5
  %v1045 = vadd.f32 %v1044, 0.5
  %v1046 = vmul.f32 %v1043, %v886
  %v1047 = vmul.f32 %v1041, %v1038
  %v1048 = vadd.f32 %v1046, %v1047
  %v1049 = vtanh.pop %v1048
  %v1050 = vmul.f32 %v1045, %v1049
  %s1051 = scalar_lea.vmem %s2, 40
  %1052 = vst [vmem:[%s1051] sm:$0xff] %v1050
  %s1053 = scalar_lea.vmem %s0, 48
  %v1054 = vld [vmem:[%s1053] sm:$0xff]
  %v1055 = vadd.f32 %v1050, %v1054
  %1056 = vmatprep.subr.mxu0 %v18
  %1057 = vmatpush1.msra.mxu0 %v17
  %1058 = vmatprep.subr.mxu0 %v22
  %1059 = vmatpush1.msra.mxu0 %v21
  %1060 = vmatprep.subr.mxu0 %v26
  %1061 = vmatpush1.msra.mxu0 %v25
  %1062 = vmatprep.subr.mxu0 %v30
  %1063 = vmatpush1.msra.mxu0 %v29
  %1064 = vmatprep.subr.mxu0 %v34
  %1065 = vmatpush1.msra.mxu0 %v33
  %1066 = vmatprep.subr.mxu0 %v38
  %1067 = vmatpush1.msra.mxu0 %v37
  %1068 = vmatprep.subr.mxu0 %v42
  %1069 = vmatpush1.msra.mxu0 %v41
  %1070 = vmatprep.subr.mxu0 %v46
  %1071 = vmatpush1.msra.mxu0 %v45
  %1072 = vmatprep.subr.mxu0 %v50
  %1073 = vmatpush1.msra.mxu0 %v49
  %1074 = vmatprep.subr.mxu0 %v54
  %1075 = vmatpush1.msra.mxu0 %v53
  %1076 = vmatprep.subr.mxu0 %v58
  %1077 = vmatpush1.msra.mxu0 %v57
  %1078 = vmatprep.subr.mxu0 %v62
  %1079 = vmatpush1.msra.mxu0 %v61
  %1080 = vmatprep.subr.mxu0 %v66
  %1081 = vmatpush1.msra.mxu0 %v65
  %1082 = vmatprep.subr.mxu0 %v70
  %1083 = vmatpush1.msra.mxu0 %v69
  %1084 = vmatprep.subr.mxu0 %v74
  %1085 = vmatpush1.msra.mxu0 %v73
  %1086 = vmatprep.subr.mxu0 %v78
  %1087 = vmatpush1.msra.mxu0 %v77
  %1088 = vmatprep.subr.mxu0 0.0
  %1089 = vmatpush1.msra.mxu0 0.0
  %1090 = vmatprep.subr.mxu0 0.0
  %1091 = vmatpush1.msra.mxu0 0.0
  %1092 = vmatprep.subr.mxu0 0.0
  %1093 = vmatpush1.msra.mxu0 0.0
  %1094 = vmatprep.subr.mxu0 0.0
  %1095 = vmatpush1.msra.mxu0 0.0
  %1096 = vmatprep.subr.mxu0 0.0
  %1097 = vmatpush1.msra.mxu0 0.0
  %1098 = vmatprep.subr.mxu0 0.0
  %1099 = vmatpush1.msra.mxu0 0.0
  %1100 = vmatprep.subr.mxu0 0.0
  %1101 = vmatpush1.msra.mxu0 0.0
  %1102 = vmatprep.subr.mxu0 0.0
  %1103 = vmatpush1.msra.mxu0 0.0
  %1104 = vmatprep.subr.mxu0 0.0
  %1105 = vmatpush1.msra.mxu0 0.0
  %1106 = vmatprep.subr.mxu0 0.0
  %1107 = vmatpush1.msra.mxu0 0.0
  %1108 = vmatprep.subr.mxu0 0.0
  %1109 = vmatpush1.msra.mxu0 0.0
  %1110 = vmatprep.subr.mxu0 0.0
  %1111 = vmatpush1.msra.mxu0 0.0
  %1112 = vmatprep.subr.mxu0 0.0
  %1113 = vmatpush1.msra.mxu0 0.0
  %1114 = vmatprep.subr.mxu0 0.0
  %1115 = vmatpush1.msra.mxu0 0.0
  %1116 = vmatprep.subr.mxu0 0.0
  %1117 = vmatpush1.msra.mxu0 0.0
  %1118 = vmatprep.subr.mxu0 0.0
  %1119 = vmatpush1.msra.mxu0 0.0
  %1120 = vmatprep.mubr.f32.mxu0 0.0
  %1121 = vmatmul.mubr.f32.gmra.mrb[0].mxu0 %v1055
  %v1122 = vpop.f32.mrb[0].mxu0
  %v1123 = vadd.f32 0.0, %v1122
  %v1124 = vpop.f32.mrb[0].mxu0
  %v1125 = vadd.f32 0.0, %v1124
  %1126 = vdwg.mxu0
  %1127 = vmatprep.subr.mxu0 %v20
  %1128 = vmatpush1.msra.mxu0 %v19
  %1129 = vmatprep.subr.mxu0 %v24
  %1130 = vmatpush1.msra.mxu0 %v23
  %1131 = vmatprep.subr.mxu0 %v28
  %1132 = vmatpush1.msra.mxu0 %v27
  %1133 = vmatprep.subr.mxu0 %v32
  %1134 = vmatpush1.msra.mxu0 %v31
  %1135 = vmatprep.subr.mxu0 %v36
  %1136 = vmatpush1.msra.mxu0 %v35
  %1137 = vmatprep.subr.mxu0 %v40
  %1138 = vmatpush1.msra.mxu0 %v39
  %1139 = vmatprep.subr.mxu0 %v44
  %1140 = vmatpush1.msra.mxu0 %v43
  %1141 = vmatprep.subr.mxu0 %v48
  %1142 = vmatpush1.msra.mxu0 %v47
  %1143 = vmatprep.subr.mxu0 %v52
  %1144 = vmatpush1.msra.mxu0 %v51
  %1145 = vmatprep.subr.mxu0 %v56
  %1146 = vmatpush1.msra.mxu0 %v55
  %1147 = vmatprep.subr.mxu0 %v60
  %1148 = vmatpush1.msra.mxu0 %v59
  %1149 = vmatprep.subr.mxu0 %v64
  %1150 = vmatpush1.msra.mxu0 %v63
  %1151 = vmatprep.subr.mxu0 %v68
  %1152 = vmatpush1.msra.mxu0 %v67
  %1153 = vmatprep.subr.mxu0 %v72
  %1154 = vmatpush1.msra.mxu0 %v71
  %1155 = vmatprep.subr.mxu0 %v76
  %1156 = vmatpush1.msra.mxu0 %v75
  %1157 = vmatprep.subr.mxu0 %v80
  %1158 = vmatpush1.msra.mxu0 %v79
  %1159 = vmatprep.subr.mxu0 0.0
  %1160 = vmatpush1.msra.mxu0 0.0
  %1161 = vmatprep.subr.mxu0 0.0
  %1162 = vmatpush1.msra.mxu0 0.0
  %1163 = vmatprep.subr.mxu0 0.0
  %1164 = vmatpush1.msra.mxu0 0.0
  %1165 = vmatprep.subr.mxu0 0.0
  %1166 = vmatpush1.msra.mxu0 0.0
  %1167 = vmatprep.subr.mxu0 0.0
  %1168 = vmatpush1.msra.mxu0 0.0
  %1169 = vmatprep.subr.mxu0 0.0
  %1170 = vmatpush1.msra.mxu0 0.0
  %1171 = vmatprep.subr.mxu0 0.0
  %1172 = vmatpush1.msra.mxu0 0.0
  %1173 = vmatprep.subr.mxu0 0.0
  %1174 = vmatpush1.msra.mxu0 0.0
  %1175 = vmatprep.subr.mxu0 0.0
  %1176 = vmatpush1.msra.mxu0 0.0
  %1177 = vmatprep.subr.mxu0 0.0
  %1178 = vmatpush1.msra.mxu0 0.0
  %1179 = vmatprep.subr.mxu0 0.0
  %1180 = vmatpush1.msra.mxu0 0.0
  %1181 = vmatprep.subr.mxu0 0.0
  %1182 = vmatpush1.msra.mxu0 0.0
  %1183 = vmatprep.subr.mxu0 0.0
  %1184 = vmatpush1.msra.mxu0 0.0
  %1185 = vmatprep.subr.mxu0 0.0
  %1186 = vmatpush1.msra.mxu0 0.0
  %1187 = vmatprep.subr.mxu0 0.0
  %1188 = vmatpush1.msra.mxu0 0.0
  %1189 = vmatprep.subr.mxu0 0.0
  %1190 = vmatpush1.msra.mxu0 0.0
  %1191 = vmatprep.mubr.f32.mxu0 0.0
  %1192 = vmatmul.mubr.f32.gmra.mrb[0].mxu0 %v1055
  %v1193 = vpop.f32.mrb[0].mxu0
  %v1194 = vadd.f32 0.0, %v1193
  %v1195 = vpop.f32.mrb[0].mxu0
  %v1196 = vadd.f32 0.0, %v1195
  %1197 = vdwg.mxu0
  %v1198 = vtanh.pop %v1123
  %v1199 = vtanh.pop %v1125
  %v1200 = vtanh.pop %v1194
  %v1201 = vtanh.pop %v1196
  %v1202 = vmul.f32 %v1198, 0.5
  %v1203 = vadd.f32 %v1202, 0.5
  %v1204 = vmul.f32 %v1199, 0.5
  %v1205 = vadd.f32 %v1204, 0.5
  %v1206 = vmul.f32 %v1201, 0.5
  %v1207 = vadd.f32 %v1206, 0.5
  %v1208 = vmul.f32 %v1205, %v1048
  %v1209 = vmul.f32 %v1203, %v1200
  %v1210 = vadd.f32 %v1208, %v1209
  %v1211 = vtanh.pop %v1210
  %v1212 = vmul.f32 %v1207, %v1211
  %s1213 = scalar_lea.vmem %s2, 48
  %1214 = vst [vmem:[%s1213] sm:$0xff] %v1212
  %s1215 = scalar_lea.vmem %s0, 56
  %v1216 = vld [vmem:[%s1215] sm:$0xff]
  %v1217 = vadd.f32 %v1212, %v1216
  %1218 = vmatprep.subr.mxu0 %v18
  %1219 = vmatpush1.msra.mxu0 %v17
  %1220 = vmatprep.subr.mxu0 %v22
  %1221 = vmatpush1.msra.mxu0 %v21
  %1222 = vmatprep.subr.mxu0 %v26
  %1223 = vmatpush1.msra.mxu0 %v25
  %1224 = vmatprep.subr.mxu0 %v30
  %1225 = vmatpush1.msra.mxu0 %v29
  %1226 = vmatprep.subr.mxu0 %v34
  %1227 = vmatpush1.msra.mxu0 %v33
  %1228 = vmatprep.subr.mxu0 %v38
  %1229 = vmatpush1.msra.mxu0 %v37
  %1230 = vmatprep.subr.mxu0 %v42
  %1231 = vmatpush1.msra.mxu0 %v41
  %1232 = vmatprep.subr.mxu0 %v46
  %1233 = vmatpush1.msra.mxu0 %v45
  %1234 = vmatprep.subr.mxu0 %v50
  %1235 = vmatpush1.msra.mxu0 %v49
  %1236 = vmatprep.subr.mxu0 %v54
  %1237 = vmatpush1.msra.mxu0 %v53
  %1238 = vmatprep.subr.mxu0 %v58
  %1239 = vmatpush1.msra.mxu0 %v57
  %1240 = vmatprep.subr.mxu0 %v62
  %1241 = vmatpush1.msra.mxu0 %v61
  %1242 = vmatprep.subr.mxu0 %v66
  %1243 = vmatpush1.msra.mxu0 %v65
  %1244 = vmatprep.subr.mxu0 %v70
  %1245 = vmatpush1.msra.mxu0 %v69
  %1246 = vmatprep.subr.mxu0 %v74
  %1247 = vmatpush1.msra.mxu0 %v73
  %1248 = vmatprep.subr.mxu0 %v78
  %1249 = vmatpush1.msra.mxu0 %v77
  %1250 = vmatprep.subr.mxu0 0.0
  %1251 = vmatpush1.msra.mxu0 0.0
  %1252 = vmatprep.subr.mxu0 0.0
  %1253 = vmatpush1.msra.mxu0 0.0
  %1254 = vmatprep.subr.mxu0 0.0
  %1255 = vmatpush1.msra.mxu0 0.0
  %1256 = vmatprep.subr.mxu0 0.0
  %1257 = vmatpush1.msra.mxu0 0.0
  %1258 = vmatprep.subr.mxu0 0.0
  %1259 = vmatpush1.msra.mxu0 0.0
  %1260 = vmatprep.subr.mxu0 0.0
  %1261 = vmatpush1.msra.mxu0 0.0
  %1262 = vmatprep.subr.mxu0 0.0
  %1263 = vmatpush1.msra.mxu0 0.0
  %1264 = vmatprep.subr.mxu0 0.0
  %1265 = vmatpush1.msra.mxu0 0.0
  %1266 = vmatprep.subr.mxu0 0.0
  %1267 = vmatpush1.msra.mxu0 0.0
  %1268 = vmatprep.subr.mxu0 0.0
  %1269 = vmatpush1.msra.mxu0 0.0
  %1270 = vmatprep.subr.mxu0 0.0
  %1271 = vmatpush1.msra.mxu0 0.0
  %1272 = vmatprep.subr.mxu0 0.0
  %1273 = vmatpush1.msra.mxu0 0.0
  %1274 = vmatprep.subr.mxu0 0.0
  %1275 = vmatpush1.msra.mxu0 0.0
  %1276 = vmatprep.subr.mxu0 0.0
  %1277 = vmatpush1.msra.mxu0 0.0
  %1278 = vmatprep.subr.mxu0 0.0
  %1279 = vmatpush1.msra.mxu0 0.0
  %1280 = vmatprep.subr.mxu0 0.0
  %1281 = vmatpush1.msra.mxu0 0.0
  %1282 = vmatprep.mubr.f32.mxu0 0.0
  %1283 = vmatmul.mubr.f32.gmra.mrb[0].mxu0 %v1217
  %v1284 = vpop.f32.mrb[0].mxu0
  %v1285 = vadd.f32 0.0, %v1284
  %v1286 = vpop.f32.mrb[0].mxu0
  %v1287 = vadd.f32 0.0, %v1286
  %1288 = vdwg.mxu0
  %1289 = vmatprep.subr.mxu0 %v20
  %1290 = vmatpush1.msra.mxu0 %v19
  %1291 = vmatprep.subr.mxu0 %v24
  %1292 = vmatpush1.msra.mxu0 %v23
  %1293 = vmatprep.subr.mxu0 %v28
  %1294 = vmatpush1.msra.mxu0 %v27
  %1295 = vmatprep.subr.mxu0 %v32
  %1296 = vmatpush1.msra.mxu0 %v31
  %1297 = vmatprep.subr.mxu0 %v36
  %1298 = vmatpush1.msra.mxu0 %v35
  %1299 = vmatprep.subr.mxu0 %v40
  %1300 = vmatpush1.msra.mxu0 %v39
  %1301 = vmatprep.subr.mxu0 %v44
  %1302 = vmatpush1.msra.mxu0 %v43
  %1303 = vmatprep.subr.mxu0 %v48
  %1304 = vmatpush1.msra.mxu0 %v47
  %1305 = vmatprep.subr.mxu0 %v52
  %1306 = vmatpush1.msra.mxu0 %v51
  %1307 = vmatprep.subr.mxu0 %v56
  %1308 = vmatpush1.msra.mxu0 %v55
  %1309 = vmatprep.subr.mxu0 %v60
  %1310 = vmatpush1.msra.mxu0 %v59
  %1311 = vmatprep.subr.mxu0 %v64
  %1312 = vmatpush1.msra.mxu0 %v63
  %1313 = vmatprep.subr.mxu0 %v68
  %1314 = vmatpush1.msra.mxu0 %v67
  %1315 = vmatprep.subr.mxu0 %v72
  %1316 = vmatpush1.msra.mxu0 %v71
  %1317 = vmatprep.subr.mxu0 %v76
  %1318 = vmatpush1.msra.mxu0 %v75
  %1319 = vmatprep.subr.mxu0 %v80
  %1320 = vmatpush1.msra.mxu0 %v79
  %1321 = vmatprep.subr.mxu0 0.0
  %1322 = vmatpush1.msra.mxu0 0.0
  %1323 = vmatprep.subr.mxu0 0.0
  %1324 = vmatpush1.msra.mxu0 0.0
  %1325 = vmatprep.subr.mxu0 0.0
  %1326 = vmatpush1.msra.mxu0 0.0
  %1327 = vmatprep.subr.mxu0 0.0
  %1328 = vmatpush1.msra.mxu0 0.0
  %1329 = vmatprep.subr.mxu0 0.0
  %1330 = vmatpush1.msra.mxu0 0.0
  %1331 = vmatprep.subr.mxu0 0.0
  %1332 = vmatpush1.msra.mxu0 0.0
  %1333 = vmatprep.subr.mxu0 0.0
  %1334 = vmatpush1.msra.mxu0 0.0
  %1335 = vmatprep.subr.mxu0 0.0
  %1336 = vmatpush1.msra.mxu0 0.0
  %1337 = vmatprep.subr.mxu0 0.0
  %1338 = vmatpush1.msra.mxu0 0.0
  %1339 = vmatprep.subr.mxu0 0.0
  %1340 = vmatpush1.msra.mxu0 0.0
  %1341 = vmatprep.subr.mxu0 0.0
  %1342 = vmatpush1.msra.mxu0 0.0
  %1343 = vmatprep.subr.mxu0 0.0
  %1344 = vmatpush1.msra.mxu0 0.0
  %1345 = vmatprep.subr.mxu0 0.0
  %1346 = vmatpush1.msra.mxu0 0.0
  %1347 = vmatprep.subr.mxu0 0.0
  %1348 = vmatpush1.msra.mxu0 0.0
  %1349 = vmatprep.subr.mxu0 0.0
  %1350 = vmatpush1.msra.mxu0 0.0
  %1351 = vmatprep.subr.mxu0 0.0
  %1352 = vmatpush1.msra.mxu0 0.0
  %1353 = vmatprep.mubr.f32.mxu0 0.0
  %1354 = vmatmul.mubr.f32.gmra.mrb[0].mxu0 %v1217
  %v1355 = vpop.f32.mrb[0].mxu0
  %v1356 = vadd.f32 0.0, %v1355
  %v1357 = vpop.f32.mrb[0].mxu0
  %v1358 = vadd.f32 0.0, %v1357
  %1359 = vdwg.mxu0
  %v1360 = vtanh.pop %v1285
  %v1361 = vtanh.pop %v1287
  %v1362 = vtanh.pop %v1356
  %v1363 = vtanh.pop %v1358
  %v1364 = vmul.f32 %v1360, 0.5
  %v1365 = vadd.f32 %v1364, 0.5
  %v1366 = vmul.f32 %v1361, 0.5
  %v1367 = vadd.f32 %v1366, 0.5
  %v1368 = vmul.f32 %v1363, 0.5
  %v1369 = vadd.f32 %v1368, 0.5
  %v1370 = vmul.f32 %v1367, %v1210
  %v1371 = vmul.f32 %v1365, %v1362
  %v1372 = vadd.f32 %v1370, %v1371
  %v1373 = vtanh.pop %v1372
  %v1374 = vmul.f32 %v1369, %v1373
  %s1375 = scalar_lea.vmem %s2, 56
  %1376 = vst [vmem:[%s1375] sm:$0xff] %v1374
  %1377 = vst [vmem:[#allocation2] sm:$0xff] %v1374
  %1378 = vst [vmem:[#allocation3] sm:$0xff] %v1372
  // Predicated region
  $region14: #{lstm_model_forward.1} parent=0 // pred_check
    _
  $region15: #{lstm_model_forward.1} parent=0 // pred_check_branch
    %1380 = sbr.rel (0) target = $region17
  $region16: #{lstm_model_forward.1} parent=0 // pred_region
    _
  $region17: #{lstm_model_forward.1} parent=0 // pred_fallthru
    _
  // Predicated region
  $region18: #{lstm_model_forward.1} parent=0 // pred_check
    _
  $region19: #{lstm_model_forward.1} parent=0 // pred_check_branch
    %1382 = sbr.rel (0) target = $region21
  $region20: #{lstm_model_forward.1} parent=0 // pred_region
    _
  $region21: #{lstm_model_forward.1} parent=0 // pred_fallthru
    _

</llo_original>
